<compile_context>
chip_gen: v5e
topology: v5e:2x2
jax: 0.10.0
libtpu: 0.0.40
codegen_flags: <defaults>
</compile_context>

<pallas_src>
import jax
import jax.numpy as jnp
import numpy as np
from jax.experimental import pallas as pl
from jax.experimental.pallas import tpu as pltpu

# ---- model hyper-parameters (mirror TPALSTM.__init__) ------------------------------
INPUT_SIZE = 4
OUTPUT_HORIZON = 4
HIDDEN_SIZE = 32            # == FILTER_NUM == FEAT_SIZE, so torch's .view() reinterpretation is shape-identical
OBS_LEN = 8
N_LAYERS = 2
FILTER_NUM = 32
FILTER_SIZE = 1             # hard-coded in TPALSTM
ATTN_LEN = OBS_LEN - 1
FEAT_SIZE = HIDDEN_SIZE - FILTER_SIZE + 1
BATCH = 2

# torch's conv_vecs.view(-1, feat_size, filter_num) is a raw memory reinterpretation; it only maps
# 1:1 onto the (C, Hd) conv output because these sizes coincide.  Static-assert that invariant.
assert HIDDEN_SIZE == FILTER_NUM == FEAT_SIZE and FILTER_SIZE == 1


# ---- the kernel ---------------------------------------------------------------------
def tpalstm_kernel(x_ref, w_hid_t, b_hid, w_ih0_t, w_hh0_t, w_comb, b0, b_rest,
                   conv_w, conv_b, lin1_t, lin1_b,
                   lin2h_t, lin2v_t, lin2_b, out_t, out_b,
                   ypred_ref):
    f32, bf16 = jnp.float32, jnp.bfloat16
    TB, _F = x_ref.shape
    Hd = w_hid_t.shape[1]
    B = b0.shape[0]
    T = TB // B
    L = w_comb.shape[0] + 1
    C, A = conv_w.shape
    assert A == T - 1 and C == Hd   # trace-time invariants

    # ---- hoisted loop-invariant loads (avoid redundant vld's inside the unroll) ------
    W_hh0 = w_hh0_t[...]
    W_comb = [w_comb[l] for l in range(L - 1)]
    B0 = b0[...]
    B_rest = [b_rest[l] for l in range(L - 1)]

    # ---- stage 0 (off the recurrence critical path) -----------------------------------
    # input projection for all timesteps + layer-0 input->gate projection, as 2 matmuls.
    inp_all = jnp.maximum(
        jnp.dot(x_ref[...], w_hid_t[...], preferred_element_type=f32) + b_hid[...], 0.0)   # (T*B, Hd)
    xg0_all = jnp.dot(inp_all.astype(bf16), w_ih0_t[...], preferred_element_type=f32)      # (T*B, 4Hd)
    xg0 = [xg0_all[t * B:(t + 1) * B, :] for t in range(T)]                                 # (B, 4Hd) each

    def gate_block(gates, c_prev):
        # gate columns are pre-permuted to [i | f | o | g] in the wrapper
        sig = jax.nn.sigmoid(gates[:, :3 * Hd])
        i_g = sig[:, 0 * Hd:1 * Hd]
        f_g = sig[:, 1 * Hd:2 * Hd]
        o_g = sig[:, 2 * Hd:3 * Hd]
        g_g = jnp.tanh(gates[:, 3 * Hd:])
        c_new = f_g * c_prev + i_g * g_g
        h_new = o_g * jnp.tanh(c_new)
        return h_new, c_new

    # ---- stage 1: serial stacked-LSTM recurrence (statically unrolled) -----------------
    h = [jnp.zeros((B, Hd), f32) for _ in range(L)]
    c = [jnp.zeros((B, Hd), f32) for _ in range(L)]
    h_hist = []
    for t in range(T):
        # layer 0: input-gate contribution was precomputed; one MXU push for h @ W_hh
        gates0 = xg0[t] + jnp.dot(h[0].astype(bf16), W_hh0, preferred_element_type=f32) + B0
        h[0], c[0] = gate_block(gates0, c[0])
        # layers >= 1: fused [h_{l-1}, h_l] @ [W_ih; W_hh] => one MXU push per layer-step
        for l in range(1, L):
            hin = jnp.concatenate([h[l - 1], h[l]], axis=1).astype(bf16)        # (B, 2Hd)
            gates = jnp.dot(hin, W_comb[l - 1], preferred_element_type=f32) + B_rest[l - 1]
            h[l], c[l] = gate_block(gates, c[l])
        if t != T - 1:
            h_hist.append(h[L - 1])          # kept as vregs (no scratch store)
    htt = h[L - 1]                           # (B, Hd)
    htt_b = htt.astype(bf16)

    # ---- stage 2: temporal pattern attention (registers only, conv batched over B) -----
    # G: (attn_len, B*Hd), row t = [relu(h_t[batch 0]), relu(h_t[batch 1]), ...]  (lane-batched)
    rows = [jnp.concatenate([ht[b:b + 1, :] for b in range(B)], axis=1) for ht in h_hist]
    G = jnp.maximum(jnp.concatenate(rows, axis=0), 0.0)                           # (A, B*Hd)
    # Conv2d(1, C, (attn_len, 1)) over NCHW (B, 1, attn_len, Hd) == one matmul over time for all B
    conv_out = jnp.dot(conv_w[...], G.astype(bf16), preferred_element_type=f32) + conv_b[...]  # (C, B*Hd)
    V = jnp.maximum(conv_out, 0.0)
    w_att = jnp.dot(htt_b, lin1_t[...], preferred_element_type=f32) + lin1_b[...]              # (B, C)
    v_rows = []
    for b in range(B):                                                            # B is tiny -> unroll
        Vb = V[:, b * Hd:(b + 1) * Hd]                                            # (C, Hd) == torch's view
        s_b = jnp.sum(Vb * w_att[b:b + 1, :], axis=1, keepdims=True)              # (C, 1)
        alpha_b = jax.nn.sigmoid(s_b)
        v_rows.append(jnp.sum(alpha_b * Vb, axis=0, keepdims=True))               # (1, Hd)
    v = jnp.concatenate(v_rows, axis=0)                                           # (B, C)

    # ---- stage 3: linear2(cat([htt, v])) + output head ----------------------------------
    new_ht = (jnp.dot(htt_b, lin2h_t[...], preferred_element_type=f32)
              + jnp.dot(v.astype(bf16), lin2v_t[...], preferred_element_type=f32)
              + lin2_b[...])                                                      # (B, Hd)
    ypred_ref[...] = (jnp.dot(new_ht.astype(bf16), out_t[...], preferred_element_type=f32)
                      + out_b[...])                                               # (B, horizon)


# ---- one-time parameter preparation (transposes / gate reorder / fusion / casts) -----
def prepare_params(p, batch=BATCH, obs_len=OBS_LEN):
    f32, bf16 = jnp.float32, jnp.bfloat16
    Hd, C, A = HIDDEN_SIZE, FILTER_NUM, obs_len - 1
    B, T = batch, obs_len

    def reorder(w):  # last-dim gate order: torch [i, f, g, o] -> kernel [i, f, o, g]
        i, f, g, o = jnp.split(w, 4, axis=-1)
        return jnp.concatenate([i, f, o, g], axis=-1)

    w_ih_t = reorder(jnp.transpose(p["w_ih"], (0, 2, 1)))        # (L, Hd, 4Hd)
    w_hh_t = reorder(jnp.transpose(p["w_hh"], (0, 2, 1)))        # (L, Hd, 4Hd)
    b_all = reorder(p["b_ih"] + p["b_hh"])                       # (L, 4Hd)
    b_bc = jnp.broadcast_to(b_all[:, None, :], (N_LAYERS, B, 4 * Hd)).astype(f32)
    w_comb = jnp.concatenate([w_ih_t[1:], w_hh_t[1:]], axis=1)   # (L-1, 2Hd, 4Hd) fused gate weights

    return (
        p["w_hid"].T.astype(bf16),                                            # (F, Hd)
        jnp.broadcast_to(p["b_hid"][None, :], (T * B, Hd)).astype(f32),       # (T*B, Hd)
        w_ih_t[0].astype(bf16),                                               # (Hd, 4Hd)
        w_hh_t[0].astype(bf16),                                               # (Hd, 4Hd)
        w_comb.astype(bf16),                                                  # (L-1, 2Hd, 4Hd)
        b_bc[0],                                                              # (B, 4Hd)
        b_bc[1:],                                                             # (L-1, B, 4Hd)
        p["conv_w"].reshape(C, A).astype(bf16),                               # (C, attn_len), filter_size==1
        jnp.broadcast_to(p["conv_b"][:, None], (C, B * Hd)).astype(f32),      # (C, B*Hd) pre-broadcast
        p["lin1_w"].T.astype(bf16),                                           # (Hd, C)
        jnp.broadcast_to(p["lin1_b"][None, :], (B, C)).astype(f32),           # (B, C)
        p["lin2_w"][:, :Hd].T.astype(bf16),                                   # (Hd, Hd)   acts on htt
        p["lin2_w"][:, Hd:].T.astype(bf16),                                   # (C, Hd)    acts on v
        jnp.broadcast_to(p["lin2_b"][None, :], (B, Hd)).astype(f32),          # (B, Hd)
        p["out_w"].T.astype(bf16),                                            # (Hd, horizon)
        jnp.broadcast_to(p["out_b"][None, :], (B, OUTPUT_HORIZON)).astype(f32),
    )


# ---- wrapper --------------------------------------------------------------------------
def tpalstm_forward(x, prepped):
    B, T, F = x.shape
    # (B, T, F) -> (T*B, F), row t*B + b = x[b, t]; gives contiguous per-timestep row pairs.
    x_tb = jnp.transpose(x, (1, 0, 2)).reshape(T * B, F).astype(jnp.bfloat16)
    vm = pl.BlockSpec(memory_space=pltpu.MemorySpace.VMEM)
    return pl.pallas_call(
        tpalstm_kernel,
        out_shape=jax.ShapeDtypeStruct((B, OUTPUT_HORIZON), jnp.float32),
        in_specs=[vm] * (1 + len(prepped)),
        out_specs=vm,
    )(x_tb, *prepped)


# ---- deterministic parameter init (shapes from the torch module) ----------------------
def init_params(key):
    keys = list(jax.random.split(key, 14))
    it = iter(keys)

    def rnd(shape, scale=0.1):
        return scale * jax.random.normal(next(it), shape, dtype=jnp.float32)

    return {
        "w_hid": rnd((HIDDEN_SIZE, INPUT_SIZE)),
        "b_hid": rnd((HIDDEN_SIZE,)),
        "w_ih": rnd((N_LAYERS, 4 * HIDDEN_SIZE, HIDDEN_SIZE)),   # LSTM input size == hidden
        "w_hh": rnd((N_LAYERS, 4 * HIDDEN_SIZE, HIDDEN_SIZE)),
        "b_ih": rnd((N_LAYERS, 4 * HIDDEN_SIZE)),
        "b_hh": rnd((N_LAYERS, 4 * HIDDEN_SIZE)),
        "conv_w": rnd((FILTER_NUM, 1, ATTN_LEN, FILTER_SIZE)),
        "conv_b": rnd((FILTER_NUM,)),
        "lin1_w": rnd((FILTER_NUM, HIDDEN_SIZE)),
        "lin1_b": rnd((FILTER_NUM,)),
        "lin2_w": rnd((HIDDEN_SIZE, HIDDEN_SIZE + FILTER_NUM)),
        "lin2_b": rnd((HIDDEN_SIZE,)),
        "out_w": rnd((OUTPUT_HORIZON, HIDDEN_SIZE)),
        "out_b": rnd((OUTPUT_HORIZON,)),
    }


# ---- plain-JAX f32 reference (mirrors the PyTorch forward exactly) ---------------------
def reference_forward(x, p):
    B, T, _ = x.shape
    Hd = HIDDEN_SIZE
    xc = jax.nn.relu(jnp.einsum("btf,hf->bth", x, p["w_hid"]) + p["b_hid"])
    h = jnp.zeros((N_LAYERS, B, Hd), jnp.float32)
    c = jnp.zeros((N_LAYERS, B, Hd), jnp.float32)
    H = jnp.zeros((B, T - 1, Hd), jnp.float32)
    for t in range(T):
        inp = xc[:, t, :]
        for l in range(N_LAYERS):
            gates = (inp @ p["w_ih"][l].T + h[l] @ p["w_hh"][l].T
                     + p["b_ih"][l] + p["b_hh"][l])
            i_g = jax.nn.sigmoid(gates[:, :Hd])
            f_g = jax.nn.sigmoid(gates[:, Hd:2 * Hd])
            g_g = jnp.tanh(gates[:, 2 * Hd:3 * Hd])
            o_g = jax.nn.sigmoid(gates[:, 3 * Hd:])
            c_new = f_g * c[l] + i_g * g_g
            h_new = o_g * jnp.tanh(c_new)
            h = h.at[l].set(h_new)
            c = c.at[l].set(c_new)
            inp = h_new
        if t != T - 1:
            H = H.at[:, t, :].set(h[-1])
    htt = h[-1]
    Hr = jax.nn.relu(H)                                                    # (B, T-1, Hd)
    w = htt @ p["lin1_w"].T + p["lin1_b"]                                  # (B, C)
    cw = p["conv_w"].reshape(FILTER_NUM, ATTN_LEN)
    conv_out = jnp.einsum("btp,ct->bcp", Hr, cw) + p["conv_b"][None, :, None]
    conv_vecs = jax.nn.relu(conv_out.reshape(B, FEAT_SIZE, FILTER_NUM))
    s = jnp.sum(conv_vecs * w[:, None, :], axis=2)
    alpha = jax.nn.sigmoid(s)
    v = jnp.sum(alpha[:, :, None] * conv_vecs, axis=1)
    concat = jnp.concatenate([htt, v], axis=1)
    new_ht = concat @ p["lin2_w"].T + p["lin2_b"]
    return new_ht @ p["out_w"].T + p["out_b"]


if __name__ == "__main__":
    key = jax.random.PRNGKey(0)
    pkey, xkey = jax.random.split(key)
    params = init_params(pkey)
    x = jax.random.normal(xkey, (BATCH, OBS_LEN, INPUT_SIZE), dtype=jnp.float32)

    prepped = prepare_params(params)          # one-time param prep (not on the per-call path)
    y = tpalstm_forward(x, prepped)
    y = jax.block_until_ready(y)

    y_ref = reference_forward(x, params)
    # bf16 MXU operands with f32 accumulation -> tolerance relaxed slightly vs. pure-f32.
    np.testing.assert_allclose(np.asarray(y), np.asarray(y_ref), rtol=1e-2, atol=1e-2)
    print("KERNEL_OK")
</pallas_src>

<mosaic_0001>
module attributes {stable_mosaic.version = 11 : i64} {
  func.func @tpalstm_kernel(%arg0: memref<16x4xbf16, #tpu.memory_space<vmem>>, %arg1: memref<4x32xbf16, #tpu.memory_space<vmem>>, %arg2: memref<16x32xf32, #tpu.memory_space<vmem>>, %arg3: memref<32x128xbf16, #tpu.memory_space<vmem>>, %arg4: memref<32x128xbf16, #tpu.memory_space<vmem>>, %arg5: memref<1x64x128xbf16, #tpu.memory_space<vmem>>, %arg6: memref<2x128xf32, #tpu.memory_space<vmem>>, %arg7: memref<1x2x128xf32, #tpu.memory_space<vmem>>, %arg8: memref<32x7xbf16, #tpu.memory_space<vmem>>, %arg9: memref<32x64xf32, #tpu.memory_space<vmem>>, %arg10: memref<32x32xbf16, #tpu.memory_space<vmem>>, %arg11: memref<2x32xf32, #tpu.memory_space<vmem>>, %arg12: memref<32x32xbf16, #tpu.memory_space<vmem>>, %arg13: memref<32x32xbf16, #tpu.memory_space<vmem>>, %arg14: memref<2x32xf32, #tpu.memory_space<vmem>>, %arg15: memref<32x4xbf16, #tpu.memory_space<vmem>>, %arg16: memref<2x4xf32, #tpu.memory_space<vmem>>, %arg17: memref<2x4xf32, #tpu.memory_space<vmem>>) attributes {dimension_semantics = [], scalar_prefetch = 0 : i64, scratch_operands = 0 : i64, tpu.core_type = #tpu.core_type<tc>} {
    %c0 = arith.constant 0 : index
    %c0_0 = arith.constant 0 : index
    %0 = vector.load %arg4[%c0, %c0_0] : memref<32x128xbf16, #tpu.memory_space<vmem>>, vector<32x128xbf16>
    %c0_1 = arith.constant 0 : index
    %c0_2 = arith.constant 0 : index
    %c0_3 = arith.constant 0 : index
    %1 = vector.load %arg5[%c0_1, %c0_2, %c0_3] : memref<1x64x128xbf16, #tpu.memory_space<vmem>>, vector<1x64x128xbf16>
    %2 = vector.shape_cast %1 : vector<1x64x128xbf16> to vector<64x128xbf16>
    %c0_4 = arith.constant 0 : index
    %c0_5 = arith.constant 0 : index
    %3 = vector.load %arg6[%c0_4, %c0_5] : memref<2x128xf32, #tpu.memory_space<vmem>>, vector<2x128xf32>
    %c0_6 = arith.constant 0 : index
    %c0_7 = arith.constant 0 : index
    %c0_8 = arith.constant 0 : index
    %4 = vector.load %arg7[%c0_6, %c0_7, %c0_8] : memref<1x2x128xf32, #tpu.memory_space<vmem>>, vector<1x2x128xf32>
    %5 = vector.shape_cast %4 : vector<1x2x128xf32> to vector<2x128xf32>
    %c0_9 = arith.constant 0 : index
    %c0_10 = arith.constant 0 : index
    %6 = vector.load %arg0[%c0_9, %c0_10] : memref<16x4xbf16, #tpu.memory_space<vmem>>, vector<16x4xbf16>
    %c0_11 = arith.constant 0 : index
    %c0_12 = arith.constant 0 : index
    %7 = vector.load %arg1[%c0_11, %c0_12] : memref<4x32xbf16, #tpu.memory_space<vmem>>, vector<4x32xbf16>
    %cst = arith.constant dense<0.000000e+00> : vector<16x32xf32>
    %8 = tpu.matmul %6, %7, %cst {dimension_numbers = #tpu.dot_dimension_numbers<[1], [0], [0], [1], [0, 0, 1, 1], [], []>} : vector<16x4xbf16>, vector<4x32xbf16>, vector<16x32xf32> -> vector<16x32xf32>
    %c0_13 = arith.constant 0 : index
    %c0_14 = arith.constant 0 : index
    %9 = vector.load %arg2[%c0_13, %c0_14] : memref<16x32xf32, #tpu.memory_space<vmem>>, vector<16x32xf32>
    %10 = arith.addf %8, %9 : vector<16x32xf32>
    %cst_15 = arith.constant 0.000000e+00 : f32
    %11 = vector.broadcast %cst_15 : f32 to vector<16x32xf32>
    %12 = arith.maximumf %10, %11 : vector<16x32xf32>
    %13 = arith.truncf %12 : vector<16x32xf32> to vector<16x32xbf16>
    %c0_16 = arith.constant 0 : index
    %c0_17 = arith.constant 0 : index
    %14 = vector.load %arg3[%c0_16, %c0_17] : memref<32x128xbf16, #tpu.memory_space<vmem>>, vector<32x128xbf16>
    %cst_18 = arith.constant dense<0.000000e+00> : vector<16x128xf32>
    %15 = tpu.matmul %13, %14, %cst_18 {dimension_numbers = #tpu.dot_dimension_numbers<[1], [0], [0], [1], [0, 0, 1, 1], [], []>} : vector<16x32xbf16>, vector<32x128xbf16>, vector<16x128xf32> -> vector<16x128xf32>
    %16 = vector.extract_strided_slice %15 {offsets = [0, 0], sizes = [2, 128], strides = [1, 1]} : vector<16x128xf32> to vector<2x128xf32>
    %17 = vector.extract_strided_slice %15 {offsets = [2, 0], sizes = [2, 128], strides = [1, 1]} : vector<16x128xf32> to vector<2x128xf32>
    %18 = vector.extract_strided_slice %15 {offsets = [4, 0], sizes = [2, 128], strides = [1, 1]} : vector<16x128xf32> to vector<2x128xf32>
    %19 = vector.extract_strided_slice %15 {offsets = [6, 0], sizes = [2, 128], strides = [1, 1]} : vector<16x128xf32> to vector<2x128xf32>
    %20 = vector.extract_strided_slice %15 {offsets = [8, 0], sizes = [2, 128], strides = [1, 1]} : vector<16x128xf32> to vector<2x128xf32>
    %21 = vector.extract_strided_slice %15 {offsets = [10, 0], sizes = [2, 128], strides = [1, 1]} : vector<16x128xf32> to vector<2x128xf32>
    %22 = vector.extract_strided_slice %15 {offsets = [12, 0], sizes = [2, 128], strides = [1, 1]} : vector<16x128xf32> to vector<2x128xf32>
    %23 = vector.extract_strided_slice %15 {offsets = [14, 0], sizes = [2, 128], strides = [1, 1]} : vector<16x128xf32> to vector<2x128xf32>
    %cst_19 = arith.constant 0.000000e+00 : f32
    %24 = vector.broadcast %cst_19 : f32 to vector<2x32xf32>
    %cst_20 = arith.constant 0.000000e+00 : f32
    %25 = vector.broadcast %cst_20 : f32 to vector<2x32xf32>
    %cst_21 = arith.constant 0.000000e+00 : f32
    %26 = vector.broadcast %cst_21 : f32 to vector<2x32xf32>
    %cst_22 = arith.constant 0.000000e+00 : f32
    %27 = vector.broadcast %cst_22 : f32 to vector<2x32xf32>
    %28 = arith.truncf %24 : vector<2x32xf32> to vector<2x32xbf16>
    %cst_23 = arith.constant dense<0.000000e+00> : vector<2x128xf32>
    %29 = tpu.matmul %28, %0, %cst_23 {dimension_numbers = #tpu.dot_dimension_numbers<[1], [0], [0], [1], [0, 0, 1, 1], [], []>} : vector<2x32xbf16>, vector<32x128xbf16>, vector<2x128xf32> -> vector<2x128xf32>
    %30 = arith.addf %16, %29 : vector<2x128xf32>
    %31 = arith.addf %30, %3 : vector<2x128xf32>
    %32 = vector.extract_strided_slice %31 {offsets = [0, 0], sizes = [2, 96], strides = [1, 1]} : vector<2x128xf32> to vector<2x96xf32>
    %33 = arith.negf %32 : vector<2x96xf32>
    %34 = math.exp %33 : vector<2x96xf32>
    %cst_24 = arith.constant 1.000000e+00 : f32
    %35 = vector.broadcast %cst_24 : f32 to vector<2x96xf32>
    %36 = arith.addf %35, %34 : vector<2x96xf32>
    %37 = arith.divf %35, %36 : vector<2x96xf32>
    %38 = vector.extract_strided_slice %37 {offsets = [0, 0], sizes = [2, 32], strides = [1, 1]} : vector<2x96xf32> to vector<2x32xf32>
    %39 = vector.extract_strided_slice %37 {offsets = [0, 32], sizes = [2, 32], strides = [1, 1]} : vector<2x96xf32> to vector<2x32xf32>
    %40 = vector.extract_strided_slice %37 {offsets = [0, 64], sizes = [2, 32], strides = [1, 1]} : vector<2x96xf32> to vector<2x32xf32>
    %41 = vector.extract_strided_slice %31 {offsets = [0, 96], sizes = [2, 32], strides = [1, 1]} : vector<2x128xf32> to vector<2x32xf32>
    %42 = math.tanh %41 : vector<2x32xf32>
    %43 = arith.mulf %39, %26 : vector<2x32xf32>
    %44 = arith.mulf %38, %42 : vector<2x32xf32>
    %45 = arith.addf %43, %44 : vector<2x32xf32>
    %46 = math.tanh %45 : vector<2x32xf32>
    %47 = arith.mulf %40, %46 : vector<2x32xf32>
    %48 = tpu.concatenate %47, %25 in 1 : vector<2x32xf32>, vector<2x32xf32> -> vector<2x64xf32>
    %49 = arith.truncf %48 : vector<2x64xf32> to vector<2x64xbf16>
    %cst_25 = arith.constant dense<0.000000e+00> : vector<2x128xf32>
    %50 = tpu.matmul %49, %2, %cst_25 {dimension_numbers = #tpu.dot_dimension_numbers<[1], [0], [0], [1], [0, 0, 1, 1], [], []>} : vector<2x64xbf16>, vector<64x128xbf16>, vector<2x128xf32> -> vector<2x128xf32>
    %51 = arith.addf %50, %5 : vector<2x128xf32>
    %52 = vector.extract_strided_slice %51 {offsets = [0, 0], sizes = [2, 96], strides = [1, 1]} : vector<2x128xf32> to vector<2x96xf32>
    %53 = arith.negf %52 : vector<2x96xf32>
    %54 = math.exp %53 : vector<2x96xf32>
    %cst_26 = arith.constant 1.000000e+00 : f32
    %55 = vector.broadcast %cst_26 : f32 to vector<2x96xf32>
    %56 = arith.addf %55, %54 : vector<2x96xf32>
    %57 = arith.divf %55, %56 : vector<2x96xf32>
    %58 = vector.extract_strided_slice %57 {offsets = [0, 0], sizes = [2, 32], strides = [1, 1]} : vector<2x96xf32> to vector<2x32xf32>
    %59 = vector.extract_strided_slice %57 {offsets = [0, 32], sizes = [2, 32], strides = [1, 1]} : vector<2x96xf32> to vector<2x32xf32>
    %60 = vector.extract_strided_slice %57 {offsets = [0, 64], sizes = [2, 32], strides = [1, 1]} : vector<2x96xf32> to vector<2x32xf32>
    %61 = vector.extract_strided_slice %51 {offsets = [0, 96], sizes = [2, 32], strides = [1, 1]} : vector<2x128xf32> to vector<2x32xf32>
    %62 = math.tanh %61 : vector<2x32xf32>
    %63 = arith.mulf %59, %27 : vector<2x32xf32>
    %64 = arith.mulf %58, %62 : vector<2x32xf32>
    %65 = arith.addf %63, %64 : vector<2x32xf32>
    %66 = math.tanh %65 : vector<2x32xf32>
    %67 = arith.mulf %60, %66 : vector<2x32xf32>
    %68 = arith.truncf %47 : vector<2x32xf32> to vector<2x32xbf16>
    %cst_27 = arith.constant dense<0.000000e+00> : vector<2x128xf32>
    %69 = tpu.matmul %68, %0, %cst_27 {dimension_numbers = #tpu.dot_dimension_numbers<[1], [0], [0], [1], [0, 0, 1, 1], [], []>} : vector<2x32xbf16>, vector<32x128xbf16>, vector<2x128xf32> -> vector<2x128xf32>
    %70 = arith.addf %17, %69 : vector<2x128xf32>
    %71 = arith.addf %70, %3 : vector<2x128xf32>
    %72 = vector.extract_strided_slice %71 {offsets = [0, 0], sizes = [2, 96], strides = [1, 1]} : vector<2x128xf32> to vector<2x96xf32>
    %73 = arith.negf %72 : vector<2x96xf32>
    %74 = math.exp %73 : vector<2x96xf32>
    %cst_28 = arith.constant 1.000000e+00 : f32
    %75 = vector.broadcast %cst_28 : f32 to vector<2x96xf32>
    %76 = arith.addf %75, %74 : vector<2x96xf32>
    %77 = arith.divf %75, %76 : vector<2x96xf32>
    %78 = vector.extract_strided_slice %77 {offsets = [0, 0], sizes = [2, 32], strides = [1, 1]} : vector<2x96xf32> to vector<2x32xf32>
    %79 = vector.extract_strided_slice %77 {offsets = [0, 32], sizes = [2, 32], strides = [1, 1]} : vector<2x96xf32> to vector<2x32xf32>
    %80 = vector.extract_strided_slice %77 {offsets = [0, 64], sizes = [2, 32], strides = [1, 1]} : vector<2x96xf32> to vector<2x32xf32>
    %81 = vector.extract_strided_slice %71 {offsets = [0, 96], sizes = [2, 32], strides = [1, 1]} : vector<2x128xf32> to vector<2x32xf32>
    %82 = math.tanh %81 : vector<2x32xf32>
    %83 = arith.mulf %79, %45 : vector<2x32xf32>
    %84 = arith.mulf %78, %82 : vector<2x32xf32>
    %85 = arith.addf %83, %84 : vector<2x32xf32>
    %86 = math.tanh %85 : vector<2x32xf32>
    %87 = arith.mulf %80, %86 : vector<2x32xf32>
    %88 = tpu.concatenate %87, %67 in 1 : vector<2x32xf32>, vector<2x32xf32> -> vector<2x64xf32>
    %89 = arith.truncf %88 : vector<2x64xf32> to vector<2x64xbf16>
    %cst_29 = arith.constant dense<0.000000e+00> : vector<2x128xf32>
    %90 = tpu.matmul %89, %2, %cst_29 {dimension_numbers = #tpu.dot_dimension_numbers<[1], [0], [0], [1], [0, 0, 1, 1], [], []>} : vector<2x64xbf16>, vector<64x128xbf16>, vector<2x128xf32> -> vector<2x128xf32>
    %91 = arith.addf %90, %5 : vector<2x128xf32>
    %92 = vector.extract_strided_slice %91 {offsets = [0, 0], sizes = [2, 96], strides = [1, 1]} : vector<2x128xf32> to vector<2x96xf32>
    %93 = arith.negf %92 : vector<2x96xf32>
    %94 = math.exp %93 : vector<2x96xf32>
    %cst_30 = arith.constant 1.000000e+00 : f32
    %95 = vector.broadcast %cst_30 : f32 to vector<2x96xf32>
    %96 = arith.addf %95, %94 : vector<2x96xf32>
    %97 = arith.divf %95, %96 : vector<2x96xf32>
    %98 = vector.extract_strided_slice %97 {offsets = [0, 0], sizes = [2, 32], strides = [1, 1]} : vector<2x96xf32> to vector<2x32xf32>
    %99 = vector.extract_strided_slice %97 {offsets = [0, 32], sizes = [2, 32], strides = [1, 1]} : vector<2x96xf32> to vector<2x32xf32>
    %100 = vector.extract_strided_slice %97 {offsets = [0, 64], sizes = [2, 32], strides = [1, 1]} : vector<2x96xf32> to vector<2x32xf32>
    %101 = vector.extract_strided_slice %91 {offsets = [0, 96], sizes = [2, 32], strides = [1, 1]} : vector<2x128xf32> to vector<2x32xf32>
    %102 = math.tanh %101 : vector<2x32xf32>
    %103 = arith.mulf %99, %65 : vector<2x32xf32>
    %104 = arith.mulf %98, %102 : vector<2x32xf32>
    %105 = arith.addf %103, %104 : vector<2x32xf32>
    %106 = math.tanh %105 : vector<2x32xf32>
    %107 = arith.mulf %100, %106 : vector<2x32xf32>
    %108 = arith.truncf %87 : vector<2x32xf32> to vector<2x32xbf16>
    %cst_31 = arith.constant dense<0.000000e+00> : vector<2x128xf32>
    %109 = tpu.matmul %108, %0, %cst_31 {dimension_numbers = #tpu.dot_dimension_numbers<[1], [0], [0], [1], [0, 0, 1, 1], [], []>} : vector<2x32xbf16>, vector<32x128xbf16>, vector<2x128xf32> -> vector<2x128xf32>
    %110 = arith.addf %18, %109 : vector<2x128xf32>
    %111 = arith.addf %110, %3 : vector<2x128xf32>
    %112 = vector.extract_strided_slice %111 {offsets = [0, 0], sizes = [2, 96], strides = [1, 1]} : vector<2x128xf32> to vector<2x96xf32>
    %113 = arith.negf %112 : vector<2x96xf32>
    %114 = math.exp %113 : vector<2x96xf32>
    %cst_32 = arith.constant 1.000000e+00 : f32
    %115 = vector.broadcast %cst_32 : f32 to vector<2x96xf32>
    %116 = arith.addf %115, %114 : vector<2x96xf32>
    %117 = arith.divf %115, %116 : vector<2x96xf32>
    %118 = vector.extract_strided_slice %117 {offsets = [0, 0], sizes = [2, 32], strides = [1, 1]} : vector<2x96xf32> to vector<2x32xf32>
    %119 = vector.extract_strided_slice %117 {offsets = [0, 32], sizes = [2, 32], strides = [1, 1]} : vector<2x96xf32> to vector<2x32xf32>
    %120 = vector.extract_strided_slice %117 {offsets = [0, 64], sizes = [2, 32], strides = [1, 1]} : vector<2x96xf32> to vector<2x32xf32>
    %121 = vector.extract_strided_slice %111 {offsets = [0, 96], sizes = [2, 32], strides = [1, 1]} : vector<2x128xf32> to vector<2x32xf32>
    %122 = math.tanh %121 : vector<2x32xf32>
    %123 = arith.mulf %119, %85 : vector<2x32xf32>
    %124 = arith.mulf %118, %122 : vector<2x32xf32>
    %125 = arith.addf %123, %124 : vector<2x32xf32>
    %126 = math.tanh %125 : vector<2x32xf32>
    %127 = arith.mulf %120, %126 : vector<2x32xf32>
    %128 = tpu.concatenate %127, %107 in 1 : vector<2x32xf32>, vector<2x32xf32> -> vector<2x64xf32>
    %129 = arith.truncf %128 : vector<2x64xf32> to vector<2x64xbf16>
    %cst_33 = arith.constant dense<0.000000e+00> : vector<2x128xf32>
    %130 = tpu.matmul %129, %2, %cst_33 {dimension_numbers = #tpu.dot_dimension_numbers<[1], [0], [0], [1], [0, 0, 1, 1], [], []>} : vector<2x64xbf16>, vector<64x128xbf16>, vector<2x128xf32> -> vector<2x128xf32>
    %131 = arith.addf %130, %5 : vector<2x128xf32>
    %132 = vector.extract_strided_slice %131 {offsets = [0, 0], sizes = [2, 96], strides = [1, 1]} : vector<2x128xf32> to vector<2x96xf32>
    %133 = arith.negf %132 : vector<2x96xf32>
    %134 = math.exp %133 : vector<2x96xf32>
    %cst_34 = arith.constant 1.000000e+00 : f32
    %135 = vector.broadcast %cst_34 : f32 to vector<2x96xf32>
    %136 = arith.addf %135, %134 : vector<2x96xf32>
    %137 = arith.divf %135, %136 : vector<2x96xf32>
    %138 = vector.extract_strided_slice %137 {offsets = [0, 0], sizes = [2, 32], strides = [1, 1]} : vector<2x96xf32> to vector<2x32xf32>
    %139 = vector.extract_strided_slice %137 {offsets = [0, 32], sizes = [2, 32], strides = [1, 1]} : vector<2x96xf32> to vector<2x32xf32>
    %140 = vector.extract_strided_slice %137 {offsets = [0, 64], sizes = [2, 32], strides = [1, 1]} : vector<2x96xf32> to vector<2x32xf32>
    %141 = vector.extract_strided_slice %131 {offsets = [0, 96], sizes = [2, 32], strides = [1, 1]} : vector<2x128xf32> to vector<2x32xf32>
    %142 = math.tanh %141 : vector<2x32xf32>
    %143 = arith.mulf %139, %105 : vector<2x32xf32>
    %144 = arith.mulf %138, %142 : vector<2x32xf32>
    %145 = arith.addf %143, %144 : vector<2x32xf32>
    %146 = math.tanh %145 : vector<2x32xf32>
    %147 = arith.mulf %140, %146 : vector<2x32xf32>
    %148 = arith.truncf %127 : vector<2x32xf32> to vector<2x32xbf16>
    %cst_35 = arith.constant dense<0.000000e+00> : vector<2x128xf32>
    %149 = tpu.matmul %148, %0, %cst_35 {dimension_numbers = #tpu.dot_dimension_numbers<[1], [0], [0], [1], [0, 0, 1, 1], [], []>} : vector<2x32xbf16>, vector<32x128xbf16>, vector<2x128xf32> -> vector<2x128xf32>
    %150 = arith.addf %19, %149 : vector<2x128xf32>
    %151 = arith.addf %150, %3 : vector<2x128xf32>
    %152 = vector.extract_strided_slice %151 {offsets = [0, 0], sizes = [2, 96], strides = [1, 1]} : vector<2x128xf32> to vector<2x96xf32>
    %153 = arith.negf %152 : vector<2x96xf32>
    %154 = math.exp %153 : vector<2x96xf32>
    %cst_36 = arith.constant 1.000000e+00 : f32
    %155 = vector.broadcast %cst_36 : f32 to vector<2x96xf32>
    %156 = arith.addf %155, %154 : vector<2x96xf32>
    %157 = arith.divf %155, %156 : vector<2x96xf32>
    %158 = vector.extract_strided_slice %157 {offsets = [0, 0], sizes = [2, 32], strides = [1, 1]} : vector<2x96xf32> to vector<2x32xf32>
    %159 = vector.extract_strided_slice %157 {offsets = [0, 32], sizes = [2, 32], strides = [1, 1]} : vector<2x96xf32> to vector<2x32xf32>
    %160 = vector.extract_strided_slice %157 {offsets = [0, 64], sizes = [2, 32], strides = [1, 1]} : vector<2x96xf32> to vector<2x32xf32>
    %161 = vector.extract_strided_slice %151 {offsets = [0, 96], sizes = [2, 32], strides = [1, 1]} : vector<2x128xf32> to vector<2x32xf32>
    %162 = math.tanh %161 : vector<2x32xf32>
    %163 = arith.mulf %159, %125 : vector<2x32xf32>
    %164 = arith.mulf %158, %162 : vector<2x32xf32>
    %165 = arith.addf %163, %164 : vector<2x32xf32>
    %166 = math.tanh %165 : vector<2x32xf32>
    %167 = arith.mulf %160, %166 : vector<2x32xf32>
    %168 = tpu.concatenate %167, %147 in 1 : vector<2x32xf32>, vector<2x32xf32> -> vector<2x64xf32>
    %169 = arith.truncf %168 : vector<2x64xf32> to vector<2x64xbf16>
    %cst_37 = arith.constant dense<0.000000e+00> : vector<2x128xf32>
    %170 = tpu.matmul %169, %2, %cst_37 {dimension_numbers = #tpu.dot_dimension_numbers<[1], [0], [0], [1], [0, 0, 1, 1], [], []>} : vector<2x64xbf16>, vector<64x128xbf16>, vector<2x128xf32> -> vector<2x128xf32>
    %171 = arith.addf %170, %5 : vector<2x128xf32>
    %172 = vector.extract_strided_slice %171 {offsets = [0, 0], sizes = [2, 96], strides = [1, 1]} : vector<2x128xf32> to vector<2x96xf32>
    %173 = arith.negf %172 : vector<2x96xf32>
    %174 = math.exp %173 : vector<2x96xf32>
    %cst_38 = arith.constant 1.000000e+00 : f32
    %175 = vector.broadcast %cst_38 : f32 to vector<2x96xf32>
    %176 = arith.addf %175, %174 : vector<2x96xf32>
    %177 = arith.divf %175, %176 : vector<2x96xf32>
    %178 = vector.extract_strided_slice %177 {offsets = [0, 0], sizes = [2, 32], strides = [1, 1]} : vector<2x96xf32> to vector<2x32xf32>
    %179 = vector.extract_strided_slice %177 {offsets = [0, 32], sizes = [2, 32], strides = [1, 1]} : vector<2x96xf32> to vector<2x32xf32>
    %180 = vector.extract_strided_slice %177 {offsets = [0, 64], sizes = [2, 32], strides = [1, 1]} : vector<2x96xf32> to vector<2x32xf32>
    %181 = vector.extract_strided_slice %171 {offsets = [0, 96], sizes = [2, 32], strides = [1, 1]} : vector<2x128xf32> to vector<2x32xf32>
    %182 = math.tanh %181 : vector<2x32xf32>
    %183 = arith.mulf %179, %145 : vector<2x32xf32>
    %184 = arith.mulf %178, %182 : vector<2x32xf32>
    %185 = arith.addf %183, %184 : vector<2x32xf32>
    %186 = math.tanh %185 : vector<2x32xf32>
    %187 = arith.mulf %180, %186 : vector<2x32xf32>
    %188 = arith.truncf %167 : vector<2x32xf32> to vector<2x32xbf16>
    %cst_39 = arith.constant dense<0.000000e+00> : vector<2x128xf32>
    %189 = tpu.matmul %188, %0, %cst_39 {dimension_numbers = #tpu.dot_dimension_numbers<[1], [0], [0], [1], [0, 0, 1, 1], [], []>} : vector<2x32xbf16>, vector<32x128xbf16>, vector<2x128xf32> -> vector<2x128xf32>
    %190 = arith.addf %20, %189 : vector<2x128xf32>
    %191 = arith.addf %190, %3 : vector<2x128xf32>
    %192 = vector.extract_strided_slice %191 {offsets = [0, 0], sizes = [2, 96], strides = [1, 1]} : vector<2x128xf32> to vector<2x96xf32>
    %193 = arith.negf %192 : vector<2x96xf32>
    %194 = math.exp %193 : vector<2x96xf32>
    %cst_40 = arith.constant 1.000000e+00 : f32
    %195 = vector.broadcast %cst_40 : f32 to vector<2x96xf32>
    %196 = arith.addf %195, %194 : vector<2x96xf32>
    %197 = arith.divf %195, %196 : vector<2x96xf32>
    %198 = vector.extract_strided_slice %197 {offsets = [0, 0], sizes = [2, 32], strides = [1, 1]} : vector<2x96xf32> to vector<2x32xf32>
    %199 = vector.extract_strided_slice %197 {offsets = [0, 32], sizes = [2, 32], strides = [1, 1]} : vector<2x96xf32> to vector<2x32xf32>
    %200 = vector.extract_strided_slice %197 {offsets = [0, 64], sizes = [2, 32], strides = [1, 1]} : vector<2x96xf32> to vector<2x32xf32>
    %201 = vector.extract_strided_slice %191 {offsets = [0, 96], sizes = [2, 32], strides = [1, 1]} : vector<2x128xf32> to vector<2x32xf32>
    %202 = math.tanh %201 : vector<2x32xf32>
    %203 = arith.mulf %199, %165 : vector<2x32xf32>
    %204 = arith.mulf %198, %202 : vector<2x32xf32>
    %205 = arith.addf %203, %204 : vector<2x32xf32>
    %206 = math.tanh %205 : vector<2x32xf32>
    %207 = arith.mulf %200, %206 : vector<2x32xf32>
    %208 = tpu.concatenate %207, %187 in 1 : vector<2x32xf32>, vector<2x32xf32> -> vector<2x64xf32>
    %209 = arith.truncf %208 : vector<2x64xf32> to vector<2x64xbf16>
    %cst_41 = arith.constant dense<0.000000e+00> : vector<2x128xf32>
    %210 = tpu.matmul %209, %2, %cst_41 {dimension_numbers = #tpu.dot_dimension_numbers<[1], [0], [0], [1], [0, 0, 1, 1], [], []>} : vector<2x64xbf16>, vector<64x128xbf16>, vector<2x128xf32> -> vector<2x128xf32>
    %211 = arith.addf %210, %5 : vector<2x128xf32>
    %212 = vector.extract_strided_slice %211 {offsets = [0, 0], sizes = [2, 96], strides = [1, 1]} : vector<2x128xf32> to vector<2x96xf32>
    %213 = arith.negf %212 : vector<2x96xf32>
    %214 = math.exp %213 : vector<2x96xf32>
    %cst_42 = arith.constant 1.000000e+00 : f32
    %215 = vector.broadcast %cst_42 : f32 to vector<2x96xf32>
    %216 = arith.addf %215, %214 : vector<2x96xf32>
    %217 = arith.divf %215, %216 : vector<2x96xf32>
    %218 = vector.extract_strided_slice %217 {offsets = [0, 0], sizes = [2, 32], strides = [1, 1]} : vector<2x96xf32> to vector<2x32xf32>
    %219 = vector.extract_strided_slice %217 {offsets = [0, 32], sizes = [2, 32], strides = [1, 1]} : vector<2x96xf32> to vector<2x32xf32>
    %220 = vector.extract_strided_slice %217 {offsets = [0, 64], sizes = [2, 32], strides = [1, 1]} : vector<2x96xf32> to vector<2x32xf32>
    %221 = vector.extract_strided_slice %211 {offsets = [0, 96], sizes = [2, 32], strides = [1, 1]} : vector<2x128xf32> to vector<2x32xf32>
    %222 = math.tanh %221 : vector<2x32xf32>
    %223 = arith.mulf %219, %185 : vector<2x32xf32>
    %224 = arith.mulf %218, %222 : vector<2x32xf32>
    %225 = arith.addf %223, %224 : vector<2x32xf32>
    %226 = math.tanh %225 : vector<2x32xf32>
    %227 = arith.mulf %220, %226 : vector<2x32xf32>
    %228 = arith.truncf %207 : vector<2x32xf32> to vector<2x32xbf16>
    %cst_43 = arith.constant dense<0.000000e+00> : vector<2x128xf32>
    %229 = tpu.matmul %228, %0, %cst_43 {dimension_numbers = #tpu.dot_dimension_numbers<[1], [0], [0], [1], [0, 0, 1, 1], [], []>} : vector<2x32xbf16>, vector<32x128xbf16>, vector<2x128xf32> -> vector<2x128xf32>
    %230 = arith.addf %21, %229 : vector<2x128xf32>
    %231 = arith.addf %230, %3 : vector<2x128xf32>
    %232 = vector.extract_strided_slice %231 {offsets = [0, 0], sizes = [2, 96], strides = [1, 1]} : vector<2x128xf32> to vector<2x96xf32>
    %233 = arith.negf %232 : vector<2x96xf32>
    %234 = math.exp %233 : vector<2x96xf32>
    %cst_44 = arith.constant 1.000000e+00 : f32
    %235 = vector.broadcast %cst_44 : f32 to vector<2x96xf32>
    %236 = arith.addf %235, %234 : vector<2x96xf32>
    %237 = arith.divf %235, %236 : vector<2x96xf32>
    %238 = vector.extract_strided_slice %237 {offsets = [0, 0], sizes = [2, 32], strides = [1, 1]} : vector<2x96xf32> to vector<2x32xf32>
    %239 = vector.extract_strided_slice %237 {offsets = [0, 32], sizes = [2, 32], strides = [1, 1]} : vector<2x96xf32> to vector<2x32xf32>
    %240 = vector.extract_strided_slice %237 {offsets = [0, 64], sizes = [2, 32], strides = [1, 1]} : vector<2x96xf32> to vector<2x32xf32>
    %241 = vector.extract_strided_slice %231 {offsets = [0, 96], sizes = [2, 32], strides = [1, 1]} : vector<2x128xf32> to vector<2x32xf32>
    %242 = math.tanh %241 : vector<2x32xf32>
    %243 = arith.mulf %239, %205 : vector<2x32xf32>
    %244 = arith.mulf %238, %242 : vector<2x32xf32>
    %245 = arith.addf %243, %244 : vector<2x32xf32>
    %246 = math.tanh %245 : vector<2x32xf32>
    %247 = arith.mulf %240, %246 : vector<2x32xf32>
    %248 = tpu.concatenate %247, %227 in 1 : vector<2x32xf32>, vector<2x32xf32> -> vector<2x64xf32>
    %249 = arith.truncf %248 : vector<2x64xf32> to vector<2x64xbf16>
    %cst_45 = arith.constant dense<0.000000e+00> : vector<2x128xf32>
    %250 = tpu.matmul %249, %2, %cst_45 {dimension_numbers = #tpu.dot_dimension_numbers<[1], [0], [0], [1], [0, 0, 1, 1], [], []>} : vector<2x64xbf16>, vector<64x128xbf16>, vector<2x128xf32> -> vector<2x128xf32>
    %251 = arith.addf %250, %5 : vector<2x128xf32>
    %252 = vector.extract_strided_slice %251 {offsets = [0, 0], sizes = [2, 96], strides = [1, 1]} : vector<2x128xf32> to vector<2x96xf32>
    %253 = arith.negf %252 : vector<2x96xf32>
    %254 = math.exp %253 : vector<2x96xf32>
    %cst_46 = arith.constant 1.000000e+00 : f32
    %255 = vector.broadcast %cst_46 : f32 to vector<2x96xf32>
    %256 = arith.addf %255, %254 : vector<2x96xf32>
    %257 = arith.divf %255, %256 : vector<2x96xf32>
    %258 = vector.extract_strided_slice %257 {offsets = [0, 0], sizes = [2, 32], strides = [1, 1]} : vector<2x96xf32> to vector<2x32xf32>
    %259 = vector.extract_strided_slice %257 {offsets = [0, 32], sizes = [2, 32], strides = [1, 1]} : vector<2x96xf32> to vector<2x32xf32>
    %260 = vector.extract_strided_slice %257 {offsets = [0, 64], sizes = [2, 32], strides = [1, 1]} : vector<2x96xf32> to vector<2x32xf32>
    %261 = vector.extract_strided_slice %251 {offsets = [0, 96], sizes = [2, 32], strides = [1, 1]} : vector<2x128xf32> to vector<2x32xf32>
    %262 = math.tanh %261 : vector<2x32xf32>
    %263 = arith.mulf %259, %225 : vector<2x32xf32>
    %264 = arith.mulf %258, %262 : vector<2x32xf32>
    %265 = arith.addf %263, %264 : vector<2x32xf32>
    %266 = math.tanh %265 : vector<2x32xf32>
    %267 = arith.mulf %260, %266 : vector<2x32xf32>
    %268 = arith.truncf %247 : vector<2x32xf32> to vector<2x32xbf16>
    %cst_47 = arith.constant dense<0.000000e+00> : vector<2x128xf32>
    %269 = tpu.matmul %268, %0, %cst_47 {dimension_numbers = #tpu.dot_dimension_numbers<[1], [0], [0], [1], [0, 0, 1, 1], [], []>} : vector<2x32xbf16>, vector<32x128xbf16>, vector<2x128xf32> -> vector<2x128xf32>
    %270 = arith.addf %22, %269 : vector<2x128xf32>
    %271 = arith.addf %270, %3 : vector<2x128xf32>
    %272 = vector.extract_strided_slice %271 {offsets = [0, 0], sizes = [2, 96], strides = [1, 1]} : vector<2x128xf32> to vector<2x96xf32>
    %273 = arith.negf %272 : vector<2x96xf32>
    %274 = math.exp %273 : vector<2x96xf32>
    %cst_48 = arith.constant 1.000000e+00 : f32
    %275 = vector.broadcast %cst_48 : f32 to vector<2x96xf32>
    %276 = arith.addf %275, %274 : vector<2x96xf32>
    %277 = arith.divf %275, %276 : vector<2x96xf32>
    %278 = vector.extract_strided_slice %277 {offsets = [0, 0], sizes = [2, 32], strides = [1, 1]} : vector<2x96xf32> to vector<2x32xf32>
    %279 = vector.extract_strided_slice %277 {offsets = [0, 32], sizes = [2, 32], strides = [1, 1]} : vector<2x96xf32> to vector<2x32xf32>
    %280 = vector.extract_strided_slice %277 {offsets = [0, 64], sizes = [2, 32], strides = [1, 1]} : vector<2x96xf32> to vector<2x32xf32>
    %281 = vector.extract_strided_slice %271 {offsets = [0, 96], sizes = [2, 32], strides = [1, 1]} : vector<2x128xf32> to vector<2x32xf32>
    %282 = math.tanh %281 : vector<2x32xf32>
    %283 = arith.mulf %279, %245 : vector<2x32xf32>
    %284 = arith.mulf %278, %282 : vector<2x32xf32>
    %285 = arith.addf %283, %284 : vector<2x32xf32>
    %286 = math.tanh %285 : vector<2x32xf32>
    %287 = arith.mulf %280, %286 : vector<2x32xf32>
    %288 = tpu.concatenate %287, %267 in 1 : vector<2x32xf32>, vector<2x32xf32> -> vector<2x64xf32>
    %289 = arith.truncf %288 : vector<2x64xf32> to vector<2x64xbf16>
    %cst_49 = arith.constant dense<0.000000e+00> : vector<2x128xf32>
    %290 = tpu.matmul %289, %2, %cst_49 {dimension_numbers = #tpu.dot_dimension_numbers<[1], [0], [0], [1], [0, 0, 1, 1], [], []>} : vector<2x64xbf16>, vector<64x128xbf16>, vector<2x128xf32> -> vector<2x128xf32>
    %291 = arith.addf %290, %5 : vector<2x128xf32>
    %292 = vector.extract_strided_slice %291 {offsets = [0, 0], sizes = [2, 96], strides = [1, 1]} : vector<2x128xf32> to vector<2x96xf32>
    %293 = arith.negf %292 : vector<2x96xf32>
    %294 = math.exp %293 : vector<2x96xf32>
    %cst_50 = arith.constant 1.000000e+00 : f32
    %295 = vector.broadcast %cst_50 : f32 to vector<2x96xf32>
    %296 = arith.addf %295, %294 : vector<2x96xf32>
    %297 = arith.divf %295, %296 : vector<2x96xf32>
    %298 = vector.extract_strided_slice %297 {offsets = [0, 0], sizes = [2, 32], strides = [1, 1]} : vector<2x96xf32> to vector<2x32xf32>
    %299 = vector.extract_strided_slice %297 {offsets = [0, 32], sizes = [2, 32], strides = [1, 1]} : vector<2x96xf32> to vector<2x32xf32>
    %300 = vector.extract_strided_slice %297 {offsets = [0, 64], sizes = [2, 32], strides = [1, 1]} : vector<2x96xf32> to vector<2x32xf32>
    %301 = vector.extract_strided_slice %291 {offsets = [0, 96], sizes = [2, 32], strides = [1, 1]} : vector<2x128xf32> to vector<2x32xf32>
    %302 = math.tanh %301 : vector<2x32xf32>
    %303 = arith.mulf %299, %265 : vector<2x32xf32>
    %304 = arith.mulf %298, %302 : vector<2x32xf32>
    %305 = arith.addf %303, %304 : vector<2x32xf32>
    %306 = math.tanh %305 : vector<2x32xf32>
    %307 = arith.mulf %300, %306 : vector<2x32xf32>
    %308 = arith.truncf %287 : vector<2x32xf32> to vector<2x32xbf16>
    %cst_51 = arith.constant dense<0.000000e+00> : vector<2x128xf32>
    %309 = tpu.matmul %308, %0, %cst_51 {dimension_numbers = #tpu.dot_dimension_numbers<[1], [0], [0], [1], [0, 0, 1, 1], [], []>} : vector<2x32xbf16>, vector<32x128xbf16>, vector<2x128xf32> -> vector<2x128xf32>
    %310 = arith.addf %23, %309 : vector<2x128xf32>
    %311 = arith.addf %310, %3 : vector<2x128xf32>
    %312 = vector.extract_strided_slice %311 {offsets = [0, 0], sizes = [2, 96], strides = [1, 1]} : vector<2x128xf32> to vector<2x96xf32>
    %313 = arith.negf %312 : vector<2x96xf32>
    %314 = math.exp %313 : vector<2x96xf32>
    %cst_52 = arith.constant 1.000000e+00 : f32
    %315 = vector.broadcast %cst_52 : f32 to vector<2x96xf32>
    %316 = arith.addf %315, %314 : vector<2x96xf32>
    %317 = arith.divf %315, %316 : vector<2x96xf32>
    %318 = vector.extract_strided_slice %317 {offsets = [0, 0], sizes = [2, 32], strides = [1, 1]} : vector<2x96xf32> to vector<2x32xf32>
    %319 = vector.extract_strided_slice %317 {offsets = [0, 32], sizes = [2, 32], strides = [1, 1]} : vector<2x96xf32> to vector<2x32xf32>
    %320 = vector.extract_strided_slice %317 {offsets = [0, 64], sizes = [2, 32], strides = [1, 1]} : vector<2x96xf32> to vector<2x32xf32>
    %321 = vector.extract_strided_slice %311 {offsets = [0, 96], sizes = [2, 32], strides = [1, 1]} : vector<2x128xf32> to vector<2x32xf32>
    %322 = math.tanh %321 : vector<2x32xf32>
    %323 = arith.mulf %319, %285 : vector<2x32xf32>
    %324 = arith.mulf %318, %322 : vector<2x32xf32>
    %325 = arith.addf %323, %324 : vector<2x32xf32>
    %326 = math.tanh %325 : vector<2x32xf32>
    %327 = arith.mulf %320, %326 : vector<2x32xf32>
    %328 = tpu.concatenate %327, %307 in 1 : vector<2x32xf32>, vector<2x32xf32> -> vector<2x64xf32>
    %329 = arith.truncf %328 : vector<2x64xf32> to vector<2x64xbf16>
    %cst_53 = arith.constant dense<0.000000e+00> : vector<2x128xf32>
    %330 = tpu.matmul %329, %2, %cst_53 {dimension_numbers = #tpu.dot_dimension_numbers<[1], [0], [0], [1], [0, 0, 1, 1], [], []>} : vector<2x64xbf16>, vector<64x128xbf16>, vector<2x128xf32> -> vector<2x128xf32>
    %331 = arith.addf %330, %5 : vector<2x128xf32>
    %332 = vector.extract_strided_slice %331 {offsets = [0, 0], sizes = [2, 96], strides = [1, 1]} : vector<2x128xf32> to vector<2x96xf32>
    %333 = arith.negf %332 : vector<2x96xf32>
    %334 = math.exp %333 : vector<2x96xf32>
    %cst_54 = arith.constant 1.000000e+00 : f32
    %335 = vector.broadcast %cst_54 : f32 to vector<2x96xf32>
    %336 = arith.addf %335, %334 : vector<2x96xf32>
    %337 = arith.divf %335, %336 : vector<2x96xf32>
    %338 = vector.extract_strided_slice %337 {offsets = [0, 0], sizes = [2, 32], strides = [1, 1]} : vector<2x96xf32> to vector<2x32xf32>
    %339 = vector.extract_strided_slice %337 {offsets = [0, 32], sizes = [2, 32], strides = [1, 1]} : vector<2x96xf32> to vector<2x32xf32>
    %340 = vector.extract_strided_slice %337 {offsets = [0, 64], sizes = [2, 32], strides = [1, 1]} : vector<2x96xf32> to vector<2x32xf32>
    %341 = vector.extract_strided_slice %331 {offsets = [0, 96], sizes = [2, 32], strides = [1, 1]} : vector<2x128xf32> to vector<2x32xf32>
    %342 = math.tanh %341 : vector<2x32xf32>
    %343 = arith.mulf %339, %305 : vector<2x32xf32>
    %344 = arith.mulf %338, %342 : vector<2x32xf32>
    %345 = arith.addf %343, %344 : vector<2x32xf32>
    %346 = math.tanh %345 : vector<2x32xf32>
    %347 = arith.mulf %340, %346 : vector<2x32xf32>
    %348 = arith.truncf %347 : vector<2x32xf32> to vector<2x32xbf16>
    %349 = vector.extract_strided_slice %67 {offsets = [0, 0], sizes = [1, 32], strides = [1, 1]} : vector<2x32xf32> to vector<1x32xf32>
    %350 = vector.extract_strided_slice %67 {offsets = [1, 0], sizes = [1, 32], strides = [1, 1]} : vector<2x32xf32> to vector<1x32xf32>
    %351 = tpu.concatenate %349, %350 in 1 : vector<1x32xf32>, vector<1x32xf32> -> vector<1x64xf32>
    %352 = vector.extract_strided_slice %107 {offsets = [0, 0], sizes = [1, 32], strides = [1, 1]} : vector<2x32xf32> to vector<1x32xf32>
    %353 = vector.extract_strided_slice %107 {offsets = [1, 0], sizes = [1, 32], strides = [1, 1]} : vector<2x32xf32> to vector<1x32xf32>
    %354 = tpu.concatenate %352, %353 in 1 : vector<1x32xf32>, vector<1x32xf32> -> vector<1x64xf32>
    %355 = vector.extract_strided_slice %147 {offsets = [0, 0], sizes = [1, 32], strides = [1, 1]} : vector<2x32xf32> to vector<1x32xf32>
    %356 = vector.extract_strided_slice %147 {offsets = [1, 0], sizes = [1, 32], strides = [1, 1]} : vector<2x32xf32> to vector<1x32xf32>
    %357 = tpu.concatenate %355, %356 in 1 : vector<1x32xf32>, vector<1x32xf32> -> vector<1x64xf32>
    %358 = vector.extract_strided_slice %187 {offsets = [0, 0], sizes = [1, 32], strides = [1, 1]} : vector<2x32xf32> to vector<1x32xf32>
    %359 = vector.extract_strided_slice %187 {offsets = [1, 0], sizes = [1, 32], strides = [1, 1]} : vector<2x32xf32> to vector<1x32xf32>
    %360 = tpu.concatenate %358, %359 in 1 : vector<1x32xf32>, vector<1x32xf32> -> vector<1x64xf32>
    %361 = vector.extract_strided_slice %227 {offsets = [0, 0], sizes = [1, 32], strides = [1, 1]} : vector<2x32xf32> to vector<1x32xf32>
    %362 = vector.extract_strided_slice %227 {offsets = [1, 0], sizes = [1, 32], strides = [1, 1]} : vector<2x32xf32> to vector<1x32xf32>
    %363 = tpu.concatenate %361, %362 in 1 : vector<1x32xf32>, vector<1x32xf32> -> vector<1x64xf32>
    %364 = vector.extract_strided_slice %267 {offsets = [0, 0], sizes = [1, 32], strides = [1, 1]} : vector<2x32xf32> to vector<1x32xf32>
    %365 = vector.extract_strided_slice %267 {offsets = [1, 0], sizes = [1, 32], strides = [1, 1]} : vector<2x32xf32> to vector<1x32xf32>
    %366 = tpu.concatenate %364, %365 in 1 : vector<1x32xf32>, vector<1x32xf32> -> vector<1x64xf32>
    %367 = vector.extract_strided_slice %307 {offsets = [0, 0], sizes = [1, 32], strides = [1, 1]} : vector<2x32xf32> to vector<1x32xf32>
    %368 = vector.extract_strided_slice %307 {offsets = [1, 0], sizes = [1, 32], strides = [1, 1]} : vector<2x32xf32> to vector<1x32xf32>
    %369 = tpu.concatenate %367, %368 in 1 : vector<1x32xf32>, vector<1x32xf32> -> vector<1x64xf32>
    %370 = tpu.concatenate %351, %354, %357, %360, %363, %366, %369 in 0 : vector<1x64xf32>, vector<1x64xf32>, vector<1x64xf32>, vector<1x64xf32>, vector<1x64xf32>, vector<1x64xf32>, vector<1x64xf32> -> vector<7x64xf32>
    %cst_55 = arith.constant 0.000000e+00 : f32
    %371 = vector.broadcast %cst_55 : f32 to vector<7x64xf32>
    %372 = arith.maximumf %370, %371 : vector<7x64xf32>
    %c0_56 = arith.constant 0 : index
    %c0_57 = arith.constant 0 : index
    %373 = vector.load %arg8[%c0_56, %c0_57] : memref<32x7xbf16, #tpu.memory_space<vmem>>, vector<32x7xbf16>
    %374 = arith.truncf %372 : vector<7x64xf32> to vector<7x64xbf16>
    %cst_58 = arith.constant dense<0.000000e+00> : vector<32x64xf32>
    %375 = tpu.matmul %373, %374, %cst_58 {dimension_numbers = #tpu.dot_dimension_numbers<[1], [0], [0], [1], [0, 0, 1, 1], [], []>} : vector<32x7xbf16>, vector<7x64xbf16>, vector<32x64xf32> -> vector<32x64xf32>
    %c0_59 = arith.constant 0 : index
    %c0_60 = arith.constant 0 : index
    %376 = vector.load %arg9[%c0_59, %c0_60] : memref<32x64xf32, #tpu.memory_space<vmem>>, vector<32x64xf32>
    %377 = arith.addf %375, %376 : vector<32x64xf32>
    %cst_61 = arith.constant 0.000000e+00 : f32
    %378 = vector.broadcast %cst_61 : f32 to vector<32x64xf32>
    %379 = arith.maximumf %377, %378 : vector<32x64xf32>
    %c0_62 = arith.constant 0 : index
    %c0_63 = arith.constant 0 : index
    %380 = vector.load %arg10[%c0_62, %c0_63] : memref<32x32xbf16, #tpu.memory_space<vmem>>, vector<32x32xbf16>
    %cst_64 = arith.constant dense<0.000000e+00> : vector<2x32xf32>
    %381 = tpu.matmul %348, %380, %cst_64 {dimension_numbers = #tpu.dot_dimension_numbers<[1], [0], [0], [1], [0, 0, 1, 1], [], []>} : vector<2x32xbf16>, vector<32x32xbf16>, vector<2x32xf32> -> vector<2x32xf32>
    %c0_65 = arith.constant 0 : index
    %c0_66 = arith.constant 0 : index
    %382 = vector.load %arg11[%c0_65, %c0_66] : memref<2x32xf32, #tpu.memory_space<vmem>>, vector<2x32xf32>
    %383 = arith.addf %381, %382 : vector<2x32xf32>
    %384 = vector.extract_strided_slice %379 {offsets = [0, 0], sizes = [32, 32], strides = [1, 1]} : vector<32x64xf32> to vector<32x32xf32>
    %385 = vector.extract_strided_slice %383 {offsets = [0, 0], sizes = [1, 32], strides = [1, 1]} : vector<2x32xf32> to vector<1x32xf32>
    %386 = vector.broadcast %385 : vector<1x32xf32> to vector<32x32xf32>
    %387 = arith.mulf %384, %386 : vector<32x32xf32>
    %cst_67 = arith.constant dense<0.000000e+00> : vector<32xf32>
    %388 = vector.multi_reduction <add>, %387, %cst_67 [1] : vector<32x32xf32> to vector<32xf32>
    %389 = vector.shape_cast %388 : vector<32xf32> to vector<32x1xf32>
    %390 = arith.negf %389 : vector<32x1xf32>
    %391 = math.exp %390 : vector<32x1xf32>
    %cst_68 = arith.constant 1.000000e+00 : f32
    %392 = vector.broadcast %cst_68 : f32 to vector<32x1xf32>
    %393 = arith.addf %392, %391 : vector<32x1xf32>
    %394 = arith.divf %392, %393 : vector<32x1xf32>
    %395 = vector.broadcast %394 : vector<32x1xf32> to vector<32x32xf32>
    %396 = arith.mulf %395, %384 : vector<32x32xf32>
    %cst_69 = arith.constant dense<0.000000e+00> : vector<32xf32>
    %397 = vector.multi_reduction <add>, %396, %cst_69 [0] : vector<32x32xf32> to vector<32xf32>
    %398 = vector.shape_cast %397 : vector<32xf32> to vector<1x32xf32>
    %399 = vector.extract_strided_slice %379 {offsets = [0, 32], sizes = [32, 32], strides = [1, 1]} : vector<32x64xf32> to vector<32x32xf32>
    %400 = vector.extract_strided_slice %383 {offsets = [1, 0], sizes = [1, 32], strides = [1, 1]} : vector<2x32xf32> to vector<1x32xf32>
    %401 = vector.broadcast %400 : vector<1x32xf32> to vector<32x32xf32>
    %402 = arith.mulf %399, %401 : vector<32x32xf32>
    %cst_70 = arith.constant dense<0.000000e+00> : vector<32xf32>
    %403 = vector.multi_reduction <add>, %402, %cst_70 [1] : vector<32x32xf32> to vector<32xf32>
    %404 = vector.shape_cast %403 : vector<32xf32> to vector<32x1xf32>
    %405 = arith.negf %404 : vector<32x1xf32>
    %406 = math.exp %405 : vector<32x1xf32>
    %cst_71 = arith.constant 1.000000e+00 : f32
    %407 = vector.broadcast %cst_71 : f32 to vector<32x1xf32>
    %408 = arith.addf %407, %406 : vector<32x1xf32>
    %409 = arith.divf %407, %408 : vector<32x1xf32>
    %410 = vector.broadcast %409 : vector<32x1xf32> to vector<32x32xf32>
    %411 = arith.mulf %410, %399 : vector<32x32xf32>
    %cst_72 = arith.constant dense<0.000000e+00> : vector<32xf32>
    %412 = vector.multi_reduction <add>, %411, %cst_72 [0] : vector<32x32xf32> to vector<32xf32>
    %413 = vector.shape_cast %412 : vector<32xf32> to vector<1x32xf32>
    %414 = tpu.concatenate %398, %413 in 0 : vector<1x32xf32>, vector<1x32xf32> -> vector<2x32xf32>
    %c0_73 = arith.constant 0 : index
    %c0_74 = arith.constant 0 : index
    %415 = vector.load %arg12[%c0_73, %c0_74] : memref<32x32xbf16, #tpu.memory_space<vmem>>, vector<32x32xbf16>
    %cst_75 = arith.constant dense<0.000000e+00> : vector<2x32xf32>
    %416 = tpu.matmul %348, %415, %cst_75 {dimension_numbers = #tpu.dot_dimension_numbers<[1], [0], [0], [1], [0, 0, 1, 1], [], []>} : vector<2x32xbf16>, vector<32x32xbf16>, vector<2x32xf32> -> vector<2x32xf32>
    %417 = arith.truncf %414 : vector<2x32xf32> to vector<2x32xbf16>
    %c0_76 = arith.constant 0 : index
    %c0_77 = arith.constant 0 : index
    %418 = vector.load %arg13[%c0_76, %c0_77] : memref<32x32xbf16, #tpu.memory_space<vmem>>, vector<32x32xbf16>
    %cst_78 = arith.constant dense<0.000000e+00> : vector<2x32xf32>
    %419 = tpu.matmul %417, %418, %cst_78 {dimension_numbers = #tpu.dot_dimension_numbers<[1], [0], [0], [1], [0, 0, 1, 1], [], []>} : vector<2x32xbf16>, vector<32x32xbf16>, vector<2x32xf32> -> vector<2x32xf32>
    %420 = arith.addf %416, %419 : vector<2x32xf32>
    %c0_79 = arith.constant 0 : index
    %c0_80 = arith.constant 0 : index
    %421 = vector.load %arg14[%c0_79, %c0_80] : memref<2x32xf32, #tpu.memory_space<vmem>>, vector<2x32xf32>
    %422 = arith.addf %420, %421 : vector<2x32xf32>
    %423 = arith.truncf %422 : vector<2x32xf32> to vector<2x32xbf16>
    %c0_81 = arith.constant 0 : index
    %c0_82 = arith.constant 0 : index
    %424 = vector.load %arg15[%c0_81, %c0_82] : memref<32x4xbf16, #tpu.memory_space<vmem>>, vector<32x4xbf16>
    %cst_83 = arith.constant dense<0.000000e+00> : vector<2x4xf32>
    %425 = tpu.matmul %423, %424, %cst_83 {dimension_numbers = #tpu.dot_dimension_numbers<[1], [0], [0], [1], [0, 0, 1, 1], [], []>} : vector<2x32xbf16>, vector<32x4xbf16>, vector<2x4xf32> -> vector<2x4xf32>
    %c0_84 = arith.constant 0 : index
    %c0_85 = arith.constant 0 : index
    %426 = vector.load %arg16[%c0_84, %c0_85] : memref<2x4xf32, #tpu.memory_space<vmem>>, vector<2x4xf32>
    %427 = arith.addf %425, %426 : vector<2x4xf32>
    %c0_86 = arith.constant 0 : index
    %c0_87 = arith.constant 0 : index
    %428 = vector.load %arg17[%c0_86, %c0_87] : memref<2x4xf32, #tpu.memory_space<vmem>>, vector<2x4xf32>
    tpu.vector_store %arg17[%c0_86, %c0_87], %427 {strides = array<i32>} : memref<2x4xf32, #tpu.memory_space<vmem>>, vector<2x4xf32>,
    return
  }
}

</mosaic_0001>

<llo_original>
// kernel: tpu_custom_call.1
$region0: #{tpu_custom_call.1}
  #allocation0 [shape = 'u32[]', space=smem, size = 0x4, offset = 0x4, fixed_abs, tag = 'smem constant byte address 0x4 - core index']
  #allocation1 [shape = 'u32[72,128]{1,0:T(1,128)}', space=vmem, size = 0x9000, scoped, tag = 'internal scratch']
  %s0 = inlined_call_operand.vmem [shape: bf16[16,4], index: 0, kind: input, shape index: {}]
  %s1 = inlined_call_operand.vmem [shape: bf16[4,32], index: 1, kind: input, shape index: {}]
  %s2 = inlined_call_operand.hbm [shape: f32[16,32], index: 2, kind: input, shape index: {}]
  %s3 = inlined_call_operand.hbm [shape: bf16[32,128], index: 3, kind: input, shape index: {}]
  %s4 = inlined_call_operand.hbm [shape: bf16[32,128], index: 4, kind: input, shape index: {}]
  %s5 = inlined_call_operand.vmem [shape: bf16[1,64,128], index: 5, kind: input, shape index: {}]
  %s6 = inlined_call_operand.vmem [shape: f32[2,128], index: 6, kind: input, shape index: {}]
  %s7 = inlined_call_operand.hbm [shape: f32[1,2,128], index: 7, kind: input, shape index: {}]
  %s8 = inlined_call_operand.vmem [shape: bf16[32,7], index: 8, kind: input, shape index: {}]
  %s9 = inlined_call_operand.hbm [shape: f32[32,64], index: 9, kind: input, shape index: {}]
  %s10 = inlined_call_operand.hbm [shape: bf16[32,32], index: 10, kind: input, shape index: {}]
  %s11 = inlined_call_operand.hbm [shape: f32[2,32], index: 11, kind: input, shape index: {}]
  %s12 = inlined_call_operand.vmem [shape: bf16[32,32], index: 12, kind: input, shape index: {}]
  %s13 = inlined_call_operand.hbm [shape: bf16[32,32], index: 13, kind: input, shape index: {}]
  %s14 = inlined_call_operand.vmem [shape: f32[2,32], index: 14, kind: input, shape index: {}]
  %s15 = inlined_call_operand.vmem [shape: bf16[32,4], index: 15, kind: input, shape index: {}]
  %s16 = inlined_call_operand.vmem [shape: f32[2,4], index: 16, kind: input, shape index: {}]
  %s17 = inlined_call_operand.hbm [shape: f32[2,4], index: 17, kind: output, shape index: {}]
  %s18 = sld [smem:[#allocation0]]
  $region110: #{tpu_custom_call.1} parent=0
    _
  %s20 = ssub.s32 1, %s18
  %s21 = scalar_select 0, %s20, %s18
  $region1: #{tpu_custom_call.1} parent=0
    #allocation2 [shape = 'u8[8192]{0}', space=vmem, size = 0x2000, scoped, tag = 'input window, operand 2, single buffered']
    #allocation3 [shape = 's32[1]{0}', space=sflag, size = 0x4, scoped, tag = 'scoped memory for tpu_custom_call.1']
    #allocation4 [shape = 's32[1]{0}', space=sflag, size = 0x4, scoped, tag = 'scoped memory for tpu_custom_call.1']
    #allocation5 [shape = 'u8[8192]{0}', space=vmem, size = 0x2000, scoped, tag = 'input window, operand 3, single buffered']
    #allocation6 [shape = 's32[1]{0}', space=sflag, size = 0x4, scoped, tag = 'scoped memory for tpu_custom_call.1']
    #allocation7 [shape = 'u8[8192]{0}', space=vmem, size = 0x2000, scoped, tag = 'input window, operand 4, single buffered']
    #allocation8 [shape = 'u8[1024]{0}', space=vmem, size = 0x400, scoped, tag = 'input window, operand 7, single buffered']
    #allocation9 [shape = 's32[1]{0}', space=sflag, size = 0x4, scoped, tag = 'scoped memory for tpu_custom_call.1']
    #allocation10 [shape = 'u8[16384]{0}', space=vmem, size = 0x4000, scoped, tag = 'input window, operand 9, single buffered']
    #allocation11 [shape = 'u8[8192]{0}', space=vmem, size = 0x2000, scoped, tag = 'input window, operand 10, single buffered']
    #allocation12 [shape = 's32[1]{0}', space=sflag, size = 0x4, scoped, tag = 'scoped memory for tpu_custom_call.1']
    #allocation13 [shape = 'u8[1024]{0}', space=vmem, size = 0x400, scoped, tag = 'input window, operand 11, single buffered']
    #allocation14 [shape = 'u8[8192]{0}', space=vmem, size = 0x2000, scoped, tag = 'input window, operand 13, single buffered']
    #allocation15 [shape = 's32[1]{0}', space=sflag, size = 0x4, scoped, tag = 'scoped memory for tpu_custom_call.1']
    #allocation16 [shape = 'u8[1024]{0}', space=vmem, size = 0x400, scoped, tag = 'output window, operand 0, single buffered']
    %22 = vsyncpa [#allocation3], 0
    %23 = vsyncpa [#allocation6], 0
    %24 = vsyncpa [#allocation9], 0
    %25 = vsyncpa [#allocation12], 0
    %26 = vsyncpa [#allocation15], 0
    %27 = vsyncpa [#allocation4], 0
    // Predicated region
    $region2: #{tpu_custom_call.1} parent=1 // pred_check
      _
    $region3: #{tpu_custom_call.1} parent=1 // pred_check_branch
      %29 = sbr.rel (0) target = $region5
    $region4: #{tpu_custom_call.1} parent=1 // pred_region
      _
    $region5: #{tpu_custom_call.1} parent=1 // pred_fallthru
      _
    // Predicated region
    $region6: #{tpu_custom_call.1} parent=1 // pred_check
      _
    $region7: #{tpu_custom_call.1} parent=1 // pred_check_branch
      %31 = sbr.rel (0) target = $region9
    $region8: #{tpu_custom_call.1} parent=1 // pred_region
      _
    $region9: #{tpu_custom_call.1} parent=1 // pred_fallthru
      _
    // Predicated region
    $region10: #{tpu_custom_call.1} parent=1 // pred_check
      _
    $region11: #{tpu_custom_call.1} parent=1 // pred_check_branch
      %33 = sbr.rel (0) target = $region13
    $region12: #{tpu_custom_call.1} parent=1 // pred_region
      %35 = vsyncadd [#allocation3], 0
      %s36 = sshll.u32 %s2, 4
      %s37 = int_to_ptr.hbm [resolvable:$true] %s36
      %s38 = sshll.u32 [#allocation2], 4
      %s39 = int_to_ptr.vmem [resolvable:$true] %s38
      %44 = dma.hbm_to_vmem [thread:$0]  %s37, 256, %s39, [#allocation3], 128, 128, 8
    $region13: #{tpu_custom_call.1} parent=1 // pred_fallthru
      _
    // Predicated region
    $region14: #{tpu_custom_call.1} parent=1 // pred_check
      _
    $region15: #{tpu_custom_call.1} parent=1 // pred_check_branch
      %46 = sbr.rel (0) target = $region17
    $region16: #{tpu_custom_call.1} parent=1 // pred_region
      %48 = vsyncadd [#allocation6], 0
      %s49 = sshll.u32 %s3, 4
      %s50 = int_to_ptr.hbm [resolvable:$true] %s49
      %s51 = sshll.u32 [#allocation5], 4
      %s52 = int_to_ptr.vmem [resolvable:$true] %s51
      %57 = dma.hbm_to_vmem [thread:$0]  %s50, 256, %s52, [#allocation6], 64, 64, 4
    $region17: #{tpu_custom_call.1} parent=1 // pred_fallthru
      _
    // Predicated region
    $region18: #{tpu_custom_call.1} parent=1 // pred_check
      _
    $region19: #{tpu_custom_call.1} parent=1 // pred_check_branch
      %59 = sbr.rel (0) target = $region21
    $region20: #{tpu_custom_call.1} parent=1 // pred_region
      %61 = vsyncadd [#allocation6], 0
      %s62 = sshll.u32 %s4, 4
      %s63 = int_to_ptr.hbm [resolvable:$true] %s62
      %s64 = sshll.u32 [#allocation7], 4
      %s65 = int_to_ptr.vmem [resolvable:$true] %s64
      %70 = dma.hbm_to_vmem [thread:$0]  %s63, 256, %s65, [#allocation6], 64, 64, 4
    $region21: #{tpu_custom_call.1} parent=1 // pred_fallthru
      _
    // Predicated region
    $region22: #{tpu_custom_call.1} parent=1 // pred_check
      _
    $region23: #{tpu_custom_call.1} parent=1 // pred_check_branch
      %72 = sbr.rel (0) target = $region25
    $region24: #{tpu_custom_call.1} parent=1 // pred_region
      _
    $region25: #{tpu_custom_call.1} parent=1 // pred_fallthru
      _
    // Predicated region
    $region26: #{tpu_custom_call.1} parent=1 // pred_check
      _
    $region27: #{tpu_custom_call.1} parent=1 // pred_check_branch
      %74 = sbr.rel (0) target = $region29
    $region28: #{tpu_custom_call.1} parent=1 // pred_region
      _
    $region29: #{tpu_custom_call.1} parent=1 // pred_fallthru
      _
    // Predicated region
    $region30: #{tpu_custom_call.1} parent=1 // pred_check
      _
    $region31: #{tpu_custom_call.1} parent=1 // pred_check_branch
      %76 = sbr.rel (0) target = $region33
    $region32: #{tpu_custom_call.1} parent=1 // pred_region
      %78 = vsyncadd [#allocation9], 0
      %s80 = sshll.u32 %s7, 4
      %s81 = int_to_ptr.hbm [resolvable:$true] %s80
      %s82 = sshll.u32 [#allocation8], 4
      %s83 = int_to_ptr.vmem [resolvable:$true] %s82
      %85 = dma.hbm_to_vmem [thread:$0]  %s81, 32, %s83, [#allocation9]
    $region33: #{tpu_custom_call.1} parent=1 // pred_fallthru
      _
    // Predicated region
    $region34: #{tpu_custom_call.1} parent=1 // pred_check
      _
    $region35: #{tpu_custom_call.1} parent=1 // pred_check_branch
      %87 = sbr.rel (0) target = $region37
    $region36: #{tpu_custom_call.1} parent=1 // pred_region
      _
    $region37: #{tpu_custom_call.1} parent=1 // pred_fallthru
      _
    // Predicated region
    $region38: #{tpu_custom_call.1} parent=1 // pred_check
      _
    $region39: #{tpu_custom_call.1} parent=1 // pred_check_branch
      %89 = sbr.rel (0) target = $region41
    $region40: #{tpu_custom_call.1} parent=1 // pred_region
      %91 = vsyncadd [#allocation9], 0
      %s92 = sshll.u32 %s9, 4
      %s93 = int_to_ptr.hbm [resolvable:$true] %s92
      %s94 = sshll.u32 [#allocation10], 4
      %s95 = int_to_ptr.vmem [resolvable:$true] %s94
      %100 = dma.hbm_to_vmem [thread:$0]  %s93, 512, %s95, [#allocation9], 128, 128, 8
    $region41: #{tpu_custom_call.1} parent=1 // pred_fallthru
      _
    // Predicated region
    $region42: #{tpu_custom_call.1} parent=1 // pred_check
      _
    $region43: #{tpu_custom_call.1} parent=1 // pred_check_branch
      %102 = sbr.rel (0) target = $region45
    $region44: #{tpu_custom_call.1} parent=1 // pred_region
      %104 = vsyncadd [#allocation12], 0
      %s105 = sshll.u32 %s10, 4
      %s106 = int_to_ptr.hbm [resolvable:$true] %s105
      %s107 = sshll.u32 [#allocation11], 4
      %s108 = int_to_ptr.vmem [resolvable:$true] %s107
      %113 = dma.hbm_to_vmem [thread:$0]  %s106, 256, %s108, [#allocation12], 64, 64, 4
    $region45: #{tpu_custom_call.1} parent=1 // pred_fallthru
      _
    // Predicated region
    $region46: #{tpu_custom_call.1} parent=1 // pred_check
      _
    $region47: #{tpu_custom_call.1} parent=1 // pred_check_branch
      %115 = sbr.rel (0) target = $region49
    $region48: #{tpu_custom_call.1} parent=1 // pred_region
      %117 = vsyncadd [#allocation12], 0
      %s119 = sshll.u32 %s11, 4
      %s120 = int_to_ptr.hbm [resolvable:$true] %s119
      %s121 = sshll.u32 [#allocation13], 4
      %s122 = int_to_ptr.vmem [resolvable:$true] %s121
      %124 = dma.hbm_to_vmem [thread:$0]  %s120, 32, %s122, [#allocation12]
    $region49: #{tpu_custom_call.1} parent=1 // pred_fallthru
      _
    // Predicated region
    $region50: #{tpu_custom_call.1} parent=1 // pred_check
      _
    $region51: #{tpu_custom_call.1} parent=1 // pred_check_branch
      %126 = sbr.rel (0) target = $region53
    $region52: #{tpu_custom_call.1} parent=1 // pred_region
      _
    $region53: #{tpu_custom_call.1} parent=1 // pred_fallthru
      _
    // Predicated region
    $region54: #{tpu_custom_call.1} parent=1 // pred_check
      _
    $region55: #{tpu_custom_call.1} parent=1 // pred_check_branch
      %128 = sbr.rel (0) target = $region57
    $region56: #{tpu_custom_call.1} parent=1 // pred_region
      %130 = vsyncadd [#allocation15], 0
      %s131 = sshll.u32 %s13, 4
      %s132 = int_to_ptr.hbm [resolvable:$true] %s131
      %s133 = sshll.u32 [#allocation14], 4
      %s134 = int_to_ptr.vmem [resolvable:$true] %s133
      %139 = dma.hbm_to_vmem [thread:$0]  %s132, 256, %s134, [#allocation15], 64, 64, 4
    $region57: #{tpu_custom_call.1} parent=1 // pred_fallthru
      _
    // Predicated region
    $region58: #{tpu_custom_call.1} parent=1 // pred_check
      _
    $region59: #{tpu_custom_call.1} parent=1 // pred_check_branch
      %141 = sbr.rel (0) target = $region61
    $region60: #{tpu_custom_call.1} parent=1 // pred_region
      _
    $region61: #{tpu_custom_call.1} parent=1 // pred_fallthru
      _
    // Predicated region
    $region62: #{tpu_custom_call.1} parent=1 // pred_check
      _
    $region63: #{tpu_custom_call.1} parent=1 // pred_check_branch
      %143 = sbr.rel (0) target = $region65
    $region64: #{tpu_custom_call.1} parent=1 // pred_region
      _
    $region65: #{tpu_custom_call.1} parent=1 // pred_fallthru
      _
    // Predicated region
    $region66: #{tpu_custom_call.1} parent=1 // pred_check
      _
    $region67: #{tpu_custom_call.1} parent=1 // pred_check_branch
      %145 = sbr.rel (0) target = $region69
    $region68: #{tpu_custom_call.1} parent=1 // pred_region
      _
    $region69: #{tpu_custom_call.1} parent=1 // pred_fallthru
      _
    // Predicated region
    $region70: #{tpu_custom_call.1} parent=1 // pred_check
      _
    $region71: #{tpu_custom_call.1} parent=1 // pred_check_branch
      %147 = sbr.rel (0) target = $region73
    $region72: #{tpu_custom_call.1} parent=1 // pred_region
      %149 = dma.done [#allocation3], 256
    $region73: #{tpu_custom_call.1} parent=1 // pred_fallthru
      _
    // Predicated region
    $region74: #{tpu_custom_call.1} parent=1 // pred_check
      _
    $region75: #{tpu_custom_call.1} parent=1 // pred_check_branch
      %151 = sbr.rel (0) target = $region77
    $region76: #{tpu_custom_call.1} parent=1 // pred_region
      %153 = dma.done [#allocation6], 256
    $region77: #{tpu_custom_call.1} parent=1 // pred_fallthru
      _
    // Predicated region
    $region78: #{tpu_custom_call.1} parent=1 // pred_check
      _
    $region79: #{tpu_custom_call.1} parent=1 // pred_check_branch
      %155 = sbr.rel (0) target = $region81
    $region80: #{tpu_custom_call.1} parent=1 // pred_region
      %157 = dma.done [#allocation6], 256
    $region81: #{tpu_custom_call.1} parent=1 // pred_fallthru
      _
    // Predicated region
    $region82: #{tpu_custom_call.1} parent=1 // pred_check
      _
    $region83: #{tpu_custom_call.1} parent=1 // pred_check_branch
      %159 = sbr.rel (0) target = $region85
    $region84: #{tpu_custom_call.1} parent=1 // pred_region
      %161 = dma.done [#allocation9], 32
    $region85: #{tpu_custom_call.1} parent=1 // pred_fallthru
      _
    // Predicated region
    $region86: #{tpu_custom_call.1} parent=1 // pred_check
      _
    $region87: #{tpu_custom_call.1} parent=1 // pred_check_branch
      %163 = sbr.rel (0) target = $region89
    $region88: #{tpu_custom_call.1} parent=1 // pred_region
      %165 = dma.done [#allocation9], 512
    $region89: #{tpu_custom_call.1} parent=1 // pred_fallthru
      _
    // Predicated region
    $region90: #{tpu_custom_call.1} parent=1 // pred_check
      _
    $region91: #{tpu_custom_call.1} parent=1 // pred_check_branch
      %167 = sbr.rel (0) target = $region93
    $region92: #{tpu_custom_call.1} parent=1 // pred_region
      %169 = dma.done [#allocation12], 256
    $region93: #{tpu_custom_call.1} parent=1 // pred_fallthru
      _
    // Predicated region
    $region94: #{tpu_custom_call.1} parent=1 // pred_check
      _
    $region95: #{tpu_custom_call.1} parent=1 // pred_check_branch
      %171 = sbr.rel (0) target = $region97
    $region96: #{tpu_custom_call.1} parent=1 // pred_region
      %173 = dma.done [#allocation12], 32
    $region97: #{tpu_custom_call.1} parent=1 // pred_fallthru
      _
    // Predicated region
    $region98: #{tpu_custom_call.1} parent=1 // pred_check
      _
    $region99: #{tpu_custom_call.1} parent=1 // pred_check_branch
      %175 = sbr.rel (0) target = $region101
    $region100: #{tpu_custom_call.1} parent=1 // pred_region
      %177 = dma.done [#allocation15], 256
    $region101: #{tpu_custom_call.1} parent=1 // pred_fallthru
      _
    %v179 = vld [vmem:[#allocation7] sm:$0xf]
    %v180 = vld [vmem:[#allocation7 + $0x4] sm:$0xf]
    %v181 = vld [vmem:[#allocation7 + $0x8] sm:$0xf]
    %v182 = vld [vmem:[#allocation7 + $0xc] sm:$0xf]
    %v183 = vld [vmem:[%s5] sm:$0xf]
    %v184 = vld [vmem:[%s5 + $0x4] sm:$0xf]
    %v185 = vld [vmem:[%s5 + $0x8] sm:$0xf]
    %v186 = vld [vmem:[%s5 + $0xc] sm:$0xf]
    %v187 = vld [vmem:[%s5 + $0x10] sm:$0xf]
    %v188 = vld [vmem:[%s5 + $0x14] sm:$0xf]
    %v189 = vld [vmem:[%s5 + $0x18] sm:$0xf]
    %v190 = vld [vmem:[%s5 + $0x1c] sm:$0xf]
    %v191 = vld [vmem:[%s6] sm:$0x3]
    %v192 = vld [vmem:[#allocation8] sm:$0x3]
    %v193 = vld [vmem:[%s0] sm:$0xf]
    %v194 = vld [vmem:[%s0 + $0x4] sm:$0xf]
    %v195 = vld [vmem:[%s1] sm:$0x3]
    %v196 = vld [vmem:[#allocation2] sm:$0xff]
    %v197 = vld [vmem:[#allocation2 + $0x8] sm:$0xff]
    %v200 = vunpack.c.l.b16 %v193
    %v201 = vunpack.c.l.b16 %v194
    %v202 = vpack.c.b16 %v201, %v200
    %vm203 = vcmask 31744
    %v205 = vsel %vm203, %v202, 0
    %vm207 = vcmask 1041408
    %v209 = vsel %vm207, %v195, 0
    %211 = vmatpush.bf16.msra.mxu0 0
    %212 = vmatpush.bf16.msra.mxu0 0
    %213 = vmatpush.bf16.msra.mxu0 0
    %214 = vmatpush.bf16.msra.mxu0 0
    %215 = vmatpush.bf16.msra.mxu0 0
    %216 = vmatpush.bf16.msra.mxu0 0
    %217 = vmatpush.bf16.msra.mxu0 0
    %218 = vmatpush.bf16.msra.mxu0 %v209
    %219 = vmatmul.bf16.gmra.mxu0 %v205
    %v220 = vpop.f32.mrf.mxu0
    %v221 = vadd.f32 %v196, %v220
    %v222 = vpop.f32.mrf.mxu0
    %v223 = vadd.f32 %v197, %v222
    %224 = vdwg.mxu0
    %v225 = vmax.f32 %v221, 0.0
    %v226 = vmax.f32 %v223, 0.0
    %v227 = vpack.c.bf16 %v226, %v225
    %v228 = vld [vmem:[#allocation5] sm:$0xf]
    %v229 = vld [vmem:[#allocation5 + $0x4] sm:$0xf]
    %v230 = vld [vmem:[#allocation5 + $0x8] sm:$0xf]
    %v231 = vld [vmem:[#allocation5 + $0xc] sm:$0xf]
    %v236 = vunpack.c.l.b16 %v228
    %v237 = vunpack.c.l.b16 %v229
    %v238 = vunpack.c.l.b16 %v230
    %v239 = vunpack.c.l.b16 %v231
    %v240 = vpack.c.b16 %v237, %v236
    %v241 = vpack.c.b16 %v239, %v238
    %vm244 = vcmask 261120
    %v246 = vsel %vm244, %v227, 0
    %248 = vmatpush.bf16.msra.mxu0 0
    %249 = vmatpush.bf16.msra.mxu0 0
    %250 = vmatpush.bf16.msra.mxu0 0
    %251 = vmatpush.bf16.msra.mxu0 0
    %252 = vmatpush.bf16.msra.mxu0 0
    %253 = vmatpush.bf16.msra.mxu0 0
    %254 = vmatpush.bf16.msra.mxu0 %v241
    %255 = vmatpush.bf16.msra.mxu0 %v240
    %256 = vmatmul.bf16.gmra.mxu0 %v246
    %v257 = vpop.f32.mrf.mxu0
    %v258 = vadd.f32 0.0, %v257
    %v259 = vpop.f32.mrf.mxu0
    %v260 = vadd.f32 0.0, %v259
    %261 = vdwg.mxu0
    %v266 = vunpack.c.l.b16 %v179
    %v267 = vunpack.c.l.b16 %v180
    %v268 = vunpack.c.l.b16 %v181
    %v269 = vunpack.c.l.b16 %v182
    %v270 = vpack.c.b16 %v267, %v266
    %v271 = vpack.c.b16 %v269, %v268
    %v275 = vsel %vm244, 0, 0
    %277 = vmatpush.bf16.msra.mxu0 0
    %278 = vmatpush.bf16.msra.mxu0 0
    %279 = vmatpush.bf16.msra.mxu0 0
    %280 = vmatpush.bf16.msra.mxu0 0
    %281 = vmatpush.bf16.msra.mxu0 0
    %282 = vmatpush.bf16.msra.mxu0 0
    %283 = vmatpush.bf16.msra.mxu0 %v271
    %284 = vmatpush.bf16.msra.mxu0 %v270
    %285 = vmatmul.bf16.gmra.mxu0 %v275
    %v286 = vpop.f32.mrf.mxu0
    %v287 = vadd.f32 0.0, %v286
    %v288 = vpop.f32.mrf.mxu0
    %289 = vdwg.mxu0
    %v290 = vadd.f32 %v258, %v287
    %v291 = vadd.f32 %v290, %v191
    %v292 = vxor.u32 %v291, 2147483648
    %v293 = vmul.f32 %v292, 1.442695
    %v294 = vpow.pop %v293
    %v295 = vadd.f32 %v294, 1.0
    %v296 = vrcp.pop %v295
    %v297 = vmul.f32 %v295, %v296
    %v298 = vsub.f32 1.0, %v297
    %v299 = vmul.f32 %v296, %v298
    %v300 = vadd.f32 %v296, %v299
    %vm301 = vweird.f32 %v295
    %vm302 = vweird.f32 %v296
    %vm303 = vmor %vm301, %vm302
    %v304 = vsel %vm303, %v296, %v300
    %v305 = vand.u32 2147483647, %v295
    %vm306 = vcmp.eq.f32.partialorder %v305, 8.507059e+37
    %v307 = vand.u32 %v295, 2147483648
    %v308 = vor.u32 1.1754944e-38, %v307
    %v309 = vsel %vm306, %v308, %v304
    %v310 = vmul.f32 1.0, %v309
    %v311 = vtanh.pop %v291
    %v312 = vmul.f32 %v310, 0.0
    %314 = vrot.lane.b32.xlu0 %v311, 32
    %v315 = vpop.permute.xlu0 %314
    %v317 = vmul.f32 %v310, %v315
    %319 = vrot.lane.b32.xlu0 %v317, 32
    %v320 = vpop.permute.xlu0 %319
    %v322 = vadd.f32 %v312, %v320
    %v323 = vtanh.pop %v322
    %325 = vrot.lane.b32.xlu0 %v323, 32
    %v326 = vpop.permute.xlu0 %325
    %v328 = vmul.f32 %v310, %v326
    %330 = vrot.lane.b32.xlu0 %v328, 64
    %v331 = vpop.permute.xlu0 %330
    %v333 = vsel %vm244, %v331, 0.0
    %v334 = vpack.c.bf16 %v333, %v333
    %v343 = vunpack.c.l.b16 %v183
    %v344 = vunpack.c.l.b16 %v184
    %v345 = vunpack.c.l.b16 %v185
    %v346 = vunpack.c.l.b16 %v186
    %v347 = vunpack.c.l.b16 %v187
    %v348 = vunpack.c.l.b16 %v188
    %v349 = vunpack.c.l.b16 %v189
    %v350 = vunpack.c.l.b16 %v190
    %v351 = vpack.c.b16 %v344, %v343
    %v352 = vpack.c.b16 %v346, %v345
    %v353 = vpack.c.b16 %v348, %v347
    %v354 = vpack.c.b16 %v350, %v349
    %vm359 = vcmask 523264
    %v361 = vsel %vm359, %v334, 0
    %363 = vmatpush.bf16.msra.mxu0 0
    %364 = vmatpush.bf16.msra.mxu0 0
    %365 = vmatpush.bf16.msra.mxu0 0
    %366 = vmatpush.bf16.msra.mxu0 0
    %367 = vmatpush.bf16.msra.mxu0 %v354
    %368 = vmatpush.bf16.msra.mxu0 %v353
    %369 = vmatpush.bf16.msra.mxu0 %v352
    %370 = vmatpush.bf16.msra.mxu0 %v351
    %371 = vmatmul.bf16.gmra.mxu0 %v361
    %v372 = vpop.f32.mrf.mxu0
    %v373 = vadd.f32 %v192, %v372
    %v374 = vpop.f32.mrf.mxu0
    %375 = vdwg.mxu0
    %v376 = vxor.u32 %v373, 2147483648
    %v377 = vmul.f32 %v376, 1.442695
    %v378 = vpow.pop %v377
    %v379 = vadd.f32 %v378, 1.0
    %v380 = vrcp.pop %v379
    %v381 = vmul.f32 %v379, %v380
    %v382 = vsub.f32 1.0, %v381
    %v383 = vmul.f32 %v380, %v382
    %v384 = vadd.f32 %v380, %v383
    %vm385 = vweird.f32 %v379
    %vm386 = vweird.f32 %v380
    %vm387 = vmor %vm385, %vm386
    %v388 = vsel %vm387, %v380, %v384
    %v389 = vand.u32 2147483647, %v379
    %vm390 = vcmp.eq.f32.partialorder %v389, 8.507059e+37
    %v391 = vand.u32 %v379, 2147483648
    %v392 = vor.u32 1.1754944e-38, %v391
    %v393 = vsel %vm390, %v392, %v388
    %v394 = vmul.f32 1.0, %v393
    %v395 = vtanh.pop %v373
    %v396 = vmul.f32 %v394, 0.0
    %398 = vrot.lane.b32.xlu0 %v395, 32
    %v399 = vpop.permute.xlu0 %398
    %v401 = vmul.f32 %v394, %v399
    %403 = vrot.lane.b32.xlu0 %v401, 32
    %v404 = vpop.permute.xlu0 %403
    %v406 = vadd.f32 %v396, %v404
    %v407 = vtanh.pop %v406
    %409 = vrot.lane.b32.xlu0 %v407, 32
    %v410 = vpop.permute.xlu0 %409
    %v412 = vmul.f32 %v394, %v410
    %v413 = vpack.c.bf16 %v328, %v328
    %415 = vrot.lane.b32.xlu0 %v413, 64
    %v416 = vpop.permute.xlu0 %415
    %v418 = vsel %vm244, %v416, 0
    %420 = vmatpush.bf16.msra.mxu0 0
    %421 = vmatpush.bf16.msra.mxu0 0
    %422 = vmatpush.bf16.msra.mxu0 0
    %423 = vmatpush.bf16.msra.mxu0 0
    %424 = vmatpush.bf16.msra.mxu0 0
    %425 = vmatpush.bf16.msra.mxu0 0
    %426 = vmatpush.bf16.msra.mxu0 %v271
    %427 = vmatpush.bf16.msra.mxu0 %v270
    %428 = vmatmul.bf16.gmra.mxu0 %v418
    %v429 = vpop.f32.mrf.mxu0
    %v430 = vadd.f32 0.0, %v429
    %v431 = vpop.f32.mrf.mxu0
    %432 = vdwg.mxu0
    %v434 = vrot.slane %v430, 6
    %v436 = vadd.f32 %v258, %v434
    %v438 = vrot.slane %v191, 6
    %v440 = vadd.f32 %v436, %v438
    %v441 = vxor.u32 %v440, 2147483648
    %v442 = vmul.f32 %v441, 1.442695
    %v443 = vpow.pop %v442
    %v444 = vadd.f32 %v443, 1.0
    %v445 = vrcp.pop %v444
    %v446 = vmul.f32 %v444, %v445
    %v447 = vsub.f32 1.0, %v446
    %v448 = vmul.f32 %v445, %v447
    %v449 = vadd.f32 %v445, %v448
    %vm450 = vweird.f32 %v444
    %vm451 = vweird.f32 %v445
    %vm452 = vmor %vm450, %vm451
    %v453 = vsel %vm452, %v445, %v449
    %v454 = vand.u32 2147483647, %v444
    %vm455 = vcmp.eq.f32.partialorder %v454, 8.507059e+37
    %v456 = vand.u32 %v444, 2147483648
    %v457 = vor.u32 1.1754944e-38, %v456
    %v458 = vsel %vm455, %v457, %v453
    %v459 = vmul.f32 1.0, %v458
    %v460 = vtanh.pop %v440
    %v462 = vrot.slane %v322, 6
    %v464 = vmul.f32 %v459, %v462
    %466 = vrot.lane.b32.xlu0 %v460, 32
    %v467 = vpop.permute.xlu0 %466
    %v469 = vmul.f32 %v459, %v467
    %471 = vrot.lane.b32.xlu0 %v469, 32
    %v472 = vpop.permute.xlu0 %471
    %v474 = vadd.f32 %v464, %v472
    %v475 = vtanh.pop %v474
    %477 = vrot.lane.b32.xlu0 %v475, 32
    %v478 = vpop.permute.xlu0 %477
    %v480 = vmul.f32 %v459, %v478
    %482 = vrot.lane.b32.xlu0 %v480, 64
    %v483 = vpop.permute.xlu0 %482
    %v486 = vrot.slane %v412, 6
    %487 = vrot.lane.b32.xlu0 %v486, 96
    %v488 = vpop.permute.xlu0 %487
    %v490 = vsel %vm244, %v483, %v488
    %v491 = vpack.c.bf16 %v490, %v490
    %v493 = vrot.slane %v491, 1
    %v495 = vsel %vm359, %v493, 0
    %497 = vmatpush.bf16.msra.mxu0 0
    %498 = vmatpush.bf16.msra.mxu0 0
    %499 = vmatpush.bf16.msra.mxu0 0
    %500 = vmatpush.bf16.msra.mxu0 0
    %501 = vmatpush.bf16.msra.mxu0 %v354
    %502 = vmatpush.bf16.msra.mxu0 %v353
    %503 = vmatpush.bf16.msra.mxu0 %v352
    %504 = vmatpush.bf16.msra.mxu0 %v351
    %505 = vmatmul.bf16.gmra.mxu0 %v495
    %v506 = vpop.f32.mrf.mxu0
    %v507 = vadd.f32 %v192, %v506
    %v508 = vpop.f32.mrf.mxu0
    %509 = vdwg.mxu0
    %v510 = vxor.u32 %v507, 2147483648
    %v511 = vmul.f32 %v510, 1.442695
    %v512 = vpow.pop %v511
    %v513 = vadd.f32 %v512, 1.0
    %v514 = vrcp.pop %v513
    %v515 = vmul.f32 %v513, %v514
    %v516 = vsub.f32 1.0, %v515
    %v517 = vmul.f32 %v514, %v516
    %v518 = vadd.f32 %v514, %v517
    %vm519 = vweird.f32 %v513
    %vm520 = vweird.f32 %v514
    %vm521 = vmor %vm519, %vm520
    %v522 = vsel %vm521, %v514, %v518
    %v523 = vand.u32 2147483647, %v513
    %vm524 = vcmp.eq.f32.partialorder %v523, 8.507059e+37
    %v525 = vand.u32 %v513, 2147483648
    %v526 = vor.u32 1.1754944e-38, %v525
    %v527 = vsel %vm524, %v526, %v522
    %v528 = vmul.f32 1.0, %v527
    %v529 = vtanh.pop %v507
    %v530 = vmul.f32 %v528, %v406
    %532 = vrot.lane.b32.xlu0 %v529, 32
    %v533 = vpop.permute.xlu0 %532
    %v535 = vmul.f32 %v528, %v533
    %537 = vrot.lane.b32.xlu0 %v535, 32
    %v538 = vpop.permute.xlu0 %537
    %v540 = vadd.f32 %v530, %v538
    %v541 = vtanh.pop %v540
    %543 = vrot.lane.b32.xlu0 %v541, 32
    %v544 = vpop.permute.xlu0 %543
    %v546 = vmul.f32 %v528, %v544
    %v547 = vpack.c.bf16 %v480, %v480
    %v549 = vrot.slane %v547, 1
    %550 = vrot.lane.b32.xlu0 %v549, 64
    %v551 = vpop.permute.xlu0 %550
    %v553 = vsel %vm244, %v551, 0
    %555 = vmatpush.bf16.msra.mxu0 0
    %556 = vmatpush.bf16.msra.mxu0 0
    %557 = vmatpush.bf16.msra.mxu0 0
    %558 = vmatpush.bf16.msra.mxu0 0
    %559 = vmatpush.bf16.msra.mxu0 0
    %560 = vmatpush.bf16.msra.mxu0 0
    %561 = vmatpush.bf16.msra.mxu0 %v271
    %562 = vmatpush.bf16.msra.mxu0 %v270
    %563 = vmatmul.bf16.gmra.mxu0 %v553
    %v564 = vpop.f32.mrf.mxu0
    %v565 = vadd.f32 0.0, %v564
    %v566 = vpop.f32.mrf.mxu0
    %567 = vdwg.mxu0
    %v569 = vrot.slane %v565, 4
    %v571 = vadd.f32 %v258, %v569
    %v572 = vrot.slane %v191, 4
    %v574 = vadd.f32 %v571, %v572
    %v575 = vxor.u32 %v574, 2147483648
    %v576 = vmul.f32 %v575, 1.442695
    %v577 = vpow.pop %v576
    %v578 = vadd.f32 %v577, 1.0
    %v579 = vrcp.pop %v578
    %v580 = vmul.f32 %v578, %v579
    %v581 = vsub.f32 1.0, %v580
    %v582 = vmul.f32 %v579, %v581
    %v583 = vadd.f32 %v579, %v582
    %vm584 = vweird.f32 %v578
    %vm585 = vweird.f32 %v579
    %vm586 = vmor %vm584, %vm585
    %v587 = vsel %vm586, %v579, %v583
    %v588 = vand.u32 2147483647, %v578
    %vm589 = vcmp.eq.f32.partialorder %v588, 8.507059e+37
    %v590 = vand.u32 %v578, 2147483648
    %v591 = vor.u32 1.1754944e-38, %v590
    %v592 = vsel %vm589, %v591, %v587
    %v593 = vmul.f32 1.0, %v592
    %v594 = vtanh.pop %v574
    %v596 = vrot.slane %v474, 6
    %v598 = vmul.f32 %v593, %v596
    %600 = vrot.lane.b32.xlu0 %v594, 32
    %v601 = vpop.permute.xlu0 %600
    %v603 = vmul.f32 %v593, %v601
    %605 = vrot.lane.b32.xlu0 %v603, 32
    %v606 = vpop.permute.xlu0 %605
    %v608 = vadd.f32 %v598, %v606
    %v609 = vtanh.pop %v608
    %611 = vrot.lane.b32.xlu0 %v609, 32
    %v612 = vpop.permute.xlu0 %611
    %v614 = vmul.f32 %v593, %v612
    %616 = vrot.lane.b32.xlu0 %v614, 64
    %v617 = vpop.permute.xlu0 %616
    %v620 = vrot.slane %v546, 4
    %621 = vrot.lane.b32.xlu0 %v620, 96
    %v622 = vpop.permute.xlu0 %621
    %v624 = vsel %vm244, %v617, %v622
    %v625 = vpack.c.bf16 %v624, %v624
    %v627 = vrot.slane %v625, 2
    %v629 = vsel %vm359, %v627, 0
    %631 = vmatpush.bf16.msra.mxu0 0
    %632 = vmatpush.bf16.msra.mxu0 0
    %633 = vmatpush.bf16.msra.mxu0 0
    %634 = vmatpush.bf16.msra.mxu0 0
    %635 = vmatpush.bf16.msra.mxu0 %v354
    %636 = vmatpush.bf16.msra.mxu0 %v353
    %637 = vmatpush.bf16.msra.mxu0 %v352
    %638 = vmatpush.bf16.msra.mxu0 %v351
    %639 = vmatmul.bf16.gmra.mxu0 %v629
    %v640 = vpop.f32.mrf.mxu0
    %v641 = vadd.f32 %v192, %v640
    %v642 = vpop.f32.mrf.mxu0
    %643 = vdwg.mxu0
    %v644 = vxor.u32 %v641, 2147483648
    %v645 = vmul.f32 %v644, 1.442695
    %v646 = vpow.pop %v645
    %v647 = vadd.f32 %v646, 1.0
    %v648 = vrcp.pop %v647
    %v649 = vmul.f32 %v647, %v648
    %v650 = vsub.f32 1.0, %v649
    %v651 = vmul.f32 %v648, %v650
    %v652 = vadd.f32 %v648, %v651
    %vm653 = vweird.f32 %v647
    %vm654 = vweird.f32 %v648
    %vm655 = vmor %vm653, %vm654
    %v656 = vsel %vm655, %v648, %v652
    %v657 = vand.u32 2147483647, %v647
    %vm658 = vcmp.eq.f32.partialorder %v657, 8.507059e+37
    %v659 = vand.u32 %v647, 2147483648
    %v660 = vor.u32 1.1754944e-38, %v659
    %v661 = vsel %vm658, %v660, %v656
    %v662 = vmul.f32 1.0, %v661
    %v663 = vtanh.pop %v641
    %v664 = vmul.f32 %v662, %v540
    %666 = vrot.lane.b32.xlu0 %v663, 32
    %v667 = vpop.permute.xlu0 %666
    %v669 = vmul.f32 %v662, %v667
    %671 = vrot.lane.b32.xlu0 %v669, 32
    %v672 = vpop.permute.xlu0 %671
    %v674 = vadd.f32 %v664, %v672
    %v675 = vtanh.pop %v674
    %677 = vrot.lane.b32.xlu0 %v675, 32
    %v678 = vpop.permute.xlu0 %677
    %v680 = vmul.f32 %v662, %v678
    %v681 = vpack.c.bf16 %v614, %v614
    %v683 = vrot.slane %v681, 2
    %684 = vrot.lane.b32.xlu0 %v683, 64
    %v685 = vpop.permute.xlu0 %684
    %v687 = vsel %vm244, %v685, 0
    %689 = vmatpush.bf16.msra.mxu0 0
    %690 = vmatpush.bf16.msra.mxu0 0
    %691 = vmatpush.bf16.msra.mxu0 0
    %692 = vmatpush.bf16.msra.mxu0 0
    %693 = vmatpush.bf16.msra.mxu0 0
    %694 = vmatpush.bf16.msra.mxu0 0
    %695 = vmatpush.bf16.msra.mxu0 %v271
    %696 = vmatpush.bf16.msra.mxu0 %v270
    %697 = vmatmul.bf16.gmra.mxu0 %v687
    %v698 = vpop.f32.mrf.mxu0
    %v699 = vadd.f32 0.0, %v698
    %v700 = vpop.f32.mrf.mxu0
    %701 = vdwg.mxu0
    %v703 = vrot.slane %v699, 2
    %v705 = vadd.f32 %v258, %v703
    %v706 = vrot.slane %v191, 2
    %v708 = vadd.f32 %v705, %v706
    %v709 = vxor.u32 %v708, 2147483648
    %v710 = vmul.f32 %v709, 1.442695
    %v711 = vpow.pop %v710
    %v712 = vadd.f32 %v711, 1.0
    %v713 = vrcp.pop %v712
    %v714 = vmul.f32 %v712, %v713
    %v715 = vsub.f32 1.0, %v714
    %v716 = vmul.f32 %v713, %v715
    %v717 = vadd.f32 %v713, %v716
    %vm718 = vweird.f32 %v712
    %vm719 = vweird.f32 %v713
    %vm720 = vmor %vm718, %vm719
    %v721 = vsel %vm720, %v713, %v717
    %v722 = vand.u32 2147483647, %v712
    %vm723 = vcmp.eq.f32.partialorder %v722, 8.507059e+37
    %v724 = vand.u32 %v712, 2147483648
    %v725 = vor.u32 1.1754944e-38, %v724
    %v726 = vsel %vm723, %v725, %v721
    %v727 = vmul.f32 1.0, %v726
    %v728 = vtanh.pop %v708
    %v730 = vrot.slane %v608, 6
    %v732 = vmul.f32 %v727, %v730
    %734 = vrot.lane.b32.xlu0 %v728, 32
    %v735 = vpop.permute.xlu0 %734
    %v737 = vmul.f32 %v727, %v735
    %739 = vrot.lane.b32.xlu0 %v737, 32
    %v740 = vpop.permute.xlu0 %739
    %v742 = vadd.f32 %v732, %v740
    %v743 = vtanh.pop %v742
    %745 = vrot.lane.b32.xlu0 %v743, 32
    %v746 = vpop.permute.xlu0 %745
    %v748 = vmul.f32 %v727, %v746
    %750 = vrot.lane.b32.xlu0 %v748, 64
    %v751 = vpop.permute.xlu0 %750
    %v754 = vrot.slane %v680, 2
    %755 = vrot.lane.b32.xlu0 %v754, 96
    %v756 = vpop.permute.xlu0 %755
    %v758 = vsel %vm244, %v751, %v756
    %v759 = vpack.c.bf16 %v758, %v758
    %v761 = vrot.slane %v759, 3
    %v763 = vsel %vm359, %v761, 0
    %765 = vmatpush.bf16.msra.mxu0 0
    %766 = vmatpush.bf16.msra.mxu0 0
    %767 = vmatpush.bf16.msra.mxu0 0
    %768 = vmatpush.bf16.msra.mxu0 0
    %769 = vmatpush.bf16.msra.mxu0 %v354
    %770 = vmatpush.bf16.msra.mxu0 %v353
    %771 = vmatpush.bf16.msra.mxu0 %v352
    %772 = vmatpush.bf16.msra.mxu0 %v351
    %773 = vmatmul.bf16.gmra.mxu0 %v763
    %v774 = vpop.f32.mrf.mxu0
    %v775 = vadd.f32 %v192, %v774
    %v776 = vpop.f32.mrf.mxu0
    %777 = vdwg.mxu0
    %v778 = vxor.u32 %v775, 2147483648
    %v779 = vmul.f32 %v778, 1.442695
    %v780 = vpow.pop %v779
    %v781 = vadd.f32 %v780, 1.0
    %v782 = vrcp.pop %v781
    %v783 = vmul.f32 %v781, %v782
    %v784 = vsub.f32 1.0, %v783
    %v785 = vmul.f32 %v782, %v784
    %v786 = vadd.f32 %v782, %v785
    %vm787 = vweird.f32 %v781
    %vm788 = vweird.f32 %v782
    %vm789 = vmor %vm787, %vm788
    %v790 = vsel %vm789, %v782, %v786
    %v791 = vand.u32 2147483647, %v781
    %vm792 = vcmp.eq.f32.partialorder %v791, 8.507059e+37
    %v793 = vand.u32 %v781, 2147483648
    %v794 = vor.u32 1.1754944e-38, %v793
    %v795 = vsel %vm792, %v794, %v790
    %v796 = vmul.f32 1.0, %v795
    %v797 = vtanh.pop %v775
    %v798 = vmul.f32 %v796, %v674
    %800 = vrot.lane.b32.xlu0 %v797, 32
    %v801 = vpop.permute.xlu0 %800
    %v803 = vmul.f32 %v796, %v801
    %805 = vrot.lane.b32.xlu0 %v803, 32
    %v806 = vpop.permute.xlu0 %805
    %v808 = vadd.f32 %v798, %v806
    %v809 = vtanh.pop %v808
    %811 = vrot.lane.b32.xlu0 %v809, 32
    %v812 = vpop.permute.xlu0 %811
    %v814 = vmul.f32 %v796, %v812
    %v815 = vpack.c.bf16 %v748, %v748
    %v817 = vrot.slane %v815, 3
    %818 = vrot.lane.b32.xlu0 %v817, 64
    %v819 = vpop.permute.xlu0 %818
    %v821 = vsel %vm244, %v819, 0
    %823 = vmatpush.bf16.msra.mxu0 0
    %824 = vmatpush.bf16.msra.mxu0 0
    %825 = vmatpush.bf16.msra.mxu0 0
    %826 = vmatpush.bf16.msra.mxu0 0
    %827 = vmatpush.bf16.msra.mxu0 0
    %828 = vmatpush.bf16.msra.mxu0 0
    %829 = vmatpush.bf16.msra.mxu0 %v271
    %830 = vmatpush.bf16.msra.mxu0 %v270
    %831 = vmatmul.bf16.gmra.mxu0 %v821
    %v832 = vpop.f32.mrf.mxu0
    %v833 = vadd.f32 0.0, %v832
    %v834 = vpop.f32.mrf.mxu0
    %835 = vdwg.mxu0
    %v836 = vadd.f32 %v260, %v833
    %v837 = vadd.f32 %v836, %v191
    %v838 = vxor.u32 %v837, 2147483648
    %v839 = vmul.f32 %v838, 1.442695
    %v840 = vpow.pop %v839
    %v841 = vadd.f32 %v840, 1.0
    %v842 = vrcp.pop %v841
    %v843 = vmul.f32 %v841, %v842
    %v844 = vsub.f32 1.0, %v843
    %v845 = vmul.f32 %v842, %v844
    %v846 = vadd.f32 %v842, %v845
    %vm847 = vweird.f32 %v841
    %vm848 = vweird.f32 %v842
    %vm849 = vmor %vm847, %vm848
    %v850 = vsel %vm849, %v842, %v846
    %v851 = vand.u32 2147483647, %v841
    %vm852 = vcmp.eq.f32.partialorder %v851, 8.507059e+37
    %v853 = vand.u32 %v841, 2147483648
    %v854 = vor.u32 1.1754944e-38, %v853
    %v855 = vsel %vm852, %v854, %v850
    %v856 = vmul.f32 1.0, %v855
    %v857 = vtanh.pop %v837
    %v859 = vrot.slane %v742, 6
    %v861 = vmul.f32 %v856, %v859
    %863 = vrot.lane.b32.xlu0 %v857, 32
    %v864 = vpop.permute.xlu0 %863
    %v866 = vmul.f32 %v856, %v864
    %868 = vrot.lane.b32.xlu0 %v866, 32
    %v869 = vpop.permute.xlu0 %868
    %v871 = vadd.f32 %v861, %v869
    %v872 = vtanh.pop %v871
    %874 = vrot.lane.b32.xlu0 %v872, 32
    %v875 = vpop.permute.xlu0 %874
    %v877 = vmul.f32 %v856, %v875
    %879 = vrot.lane.b32.xlu0 %v877, 64
    %v880 = vpop.permute.xlu0 %879
    %883 = vrot.lane.b32.xlu0 %v814, 96
    %v884 = vpop.permute.xlu0 %883
    %v886 = vsel %vm244, %v880, %v884
    %v887 = vpack.c.bf16 %v886, %v886
    %v889 = vsel %vm359, %v887, 0
    %891 = vmatpush.bf16.msra.mxu0 0
    %892 = vmatpush.bf16.msra.mxu0 0
    %893 = vmatpush.bf16.msra.mxu0 0
    %894 = vmatpush.bf16.msra.mxu0 0
    %895 = vmatpush.bf16.msra.mxu0 %v354
    %896 = vmatpush.bf16.msra.mxu0 %v353
    %897 = vmatpush.bf16.msra.mxu0 %v352
    %898 = vmatpush.bf16.msra.mxu0 %v351
    %899 = vmatmul.bf16.gmra.mxu0 %v889
    %v900 = vpop.f32.mrf.mxu0
    %v901 = vadd.f32 %v192, %v900
    %v902 = vpop.f32.mrf.mxu0
    %903 = vdwg.mxu0
    %v904 = vxor.u32 %v901, 2147483648
    %v905 = vmul.f32 %v904, 1.442695
    %v906 = vpow.pop %v905
    %v907 = vadd.f32 %v906, 1.0
    %v908 = vrcp.pop %v907
    %v909 = vmul.f32 %v907, %v908
    %v910 = vsub.f32 1.0, %v909
    %v911 = vmul.f32 %v908, %v910
    %v912 = vadd.f32 %v908, %v911
    %vm913 = vweird.f32 %v907
    %vm914 = vweird.f32 %v908
    %vm915 = vmor %vm913, %vm914
    %v916 = vsel %vm915, %v908, %v912
    %v917 = vand.u32 2147483647, %v907
    %vm918 = vcmp.eq.f32.partialorder %v917, 8.507059e+37
    %v919 = vand.u32 %v907, 2147483648
    %v920 = vor.u32 1.1754944e-38, %v919
    %v921 = vsel %vm918, %v920, %v916
    %v922 = vmul.f32 1.0, %v921
    %v923 = vtanh.pop %v901
    %v924 = vmul.f32 %v922, %v808
    %926 = vrot.lane.b32.xlu0 %v923, 32
    %v927 = vpop.permute.xlu0 %926
    %v929 = vmul.f32 %v922, %v927
    %931 = vrot.lane.b32.xlu0 %v929, 32
    %v932 = vpop.permute.xlu0 %931
    %v934 = vadd.f32 %v924, %v932
    %v935 = vtanh.pop %v934
    %937 = vrot.lane.b32.xlu0 %v935, 32
    %v938 = vpop.permute.xlu0 %937
    %v940 = vmul.f32 %v922, %v938
    %v941 = vpack.c.bf16 %v877, %v877
    %943 = vrot.lane.b32.xlu0 %v941, 64
    %v944 = vpop.permute.xlu0 %943
    %v946 = vsel %vm244, %v944, 0
    %948 = vmatpush.bf16.msra.mxu0 0
    %949 = vmatpush.bf16.msra.mxu0 0
    %950 = vmatpush.bf16.msra.mxu0 0
    %951 = vmatpush.bf16.msra.mxu0 0
    %952 = vmatpush.bf16.msra.mxu0 0
    %953 = vmatpush.bf16.msra.mxu0 0
    %954 = vmatpush.bf16.msra.mxu0 %v271
    %955 = vmatpush.bf16.msra.mxu0 %v270
    %956 = vmatmul.bf16.gmra.mxu0 %v946
    %v957 = vpop.f32.mrf.mxu0
    %v958 = vadd.f32 0.0, %v957
    %v959 = vpop.f32.mrf.mxu0
    %960 = vdwg.mxu0
    %v962 = vrot.slane %v958, 6
    %v964 = vadd.f32 %v260, %v962
    %v965 = vadd.f32 %v964, %v438
    %v966 = vxor.u32 %v965, 2147483648
    %v967 = vmul.f32 %v966, 1.442695
    %v968 = vpow.pop %v967
    %v969 = vadd.f32 %v968, 1.0
    %v970 = vrcp.pop %v969
    %v971 = vmul.f32 %v969, %v970
    %v972 = vsub.f32 1.0, %v971
    %v973 = vmul.f32 %v970, %v972
    %v974 = vadd.f32 %v970, %v973
    %vm975 = vweird.f32 %v969
    %vm976 = vweird.f32 %v970
    %vm977 = vmor %vm975, %vm976
    %v978 = vsel %vm977, %v970, %v974
    %v979 = vand.u32 2147483647, %v969
    %vm980 = vcmp.eq.f32.partialorder %v979, 8.507059e+37
    %v981 = vand.u32 %v969, 2147483648
    %v982 = vor.u32 1.1754944e-38, %v981
    %v983 = vsel %vm980, %v982, %v978
    %v984 = vmul.f32 1.0, %v983
    %v985 = vtanh.pop %v965
    %v987 = vrot.slane %v871, 6
    %v989 = vmul.f32 %v984, %v987
    %991 = vrot.lane.b32.xlu0 %v985, 32
    %v992 = vpop.permute.xlu0 %991
    %v994 = vmul.f32 %v984, %v992
    %996 = vrot.lane.b32.xlu0 %v994, 32
    %v997 = vpop.permute.xlu0 %996
    %v999 = vadd.f32 %v989, %v997
    %v1000 = vtanh.pop %v999
    %1002 = vrot.lane.b32.xlu0 %v1000, 32
    %v1003 = vpop.permute.xlu0 %1002
    %v1005 = vmul.f32 %v984, %v1003
    %1007 = vrot.lane.b32.xlu0 %v1005, 64
    %v1008 = vpop.permute.xlu0 %1007
    %v1011 = vrot.slane %v940, 6
    %1012 = vrot.lane.b32.xlu0 %v1011, 96
    %v1013 = vpop.permute.xlu0 %1012
    %v1015 = vsel %vm244, %v1008, %v1013
    %v1016 = vpack.c.bf16 %v1015, %v1015
    %v1018 = vrot.slane %v1016, 1
    %v1020 = vsel %vm359, %v1018, 0
    %1022 = vmatpush.bf16.msra.mxu0 0
    %1023 = vmatpush.bf16.msra.mxu0 0
    %1024 = vmatpush.bf16.msra.mxu0 0
    %1025 = vmatpush.bf16.msra.mxu0 0
    %1026 = vmatpush.bf16.msra.mxu0 %v354
    %1027 = vmatpush.bf16.msra.mxu0 %v353
    %1028 = vmatpush.bf16.msra.mxu0 %v352
    %1029 = vmatpush.bf16.msra.mxu0 %v351
    %1030 = vmatmul.bf16.gmra.mxu0 %v1020
    %v1031 = vpop.f32.mrf.mxu0
    %v1032 = vadd.f32 %v192, %v1031
    %v1033 = vpop.f32.mrf.mxu0
    %1034 = vdwg.mxu0
    %v1035 = vxor.u32 %v1032, 2147483648
    %v1036 = vmul.f32 %v1035, 1.442695
    %v1037 = vpow.pop %v1036
    %v1038 = vadd.f32 %v1037, 1.0
    %v1039 = vrcp.pop %v1038
    %v1040 = vmul.f32 %v1038, %v1039
    %v1041 = vsub.f32 1.0, %v1040
    %v1042 = vmul.f32 %v1039, %v1041
    %v1043 = vadd.f32 %v1039, %v1042
    %vm1044 = vweird.f32 %v1038
    %vm1045 = vweird.f32 %v1039
    %vm1046 = vmor %vm1044, %vm1045
    %v1047 = vsel %vm1046, %v1039, %v1043
    %v1048 = vand.u32 2147483647, %v1038
    %vm1049 = vcmp.eq.f32.partialorder %v1048, 8.507059e+37
    %v1050 = vand.u32 %v1038, 2147483648
    %v1051 = vor.u32 1.1754944e-38, %v1050
    %v1052 = vsel %vm1049, %v1051, %v1047
    %v1053 = vmul.f32 1.0, %v1052
    %v1054 = vtanh.pop %v1032
    %v1055 = vmul.f32 %v1053, %v934
    %1057 = vrot.lane.b32.xlu0 %v1054, 32
    %v1058 = vpop.permute.xlu0 %1057
    %v1060 = vmul.f32 %v1053, %v1058
    %1062 = vrot.lane.b32.xlu0 %v1060, 32
    %v1063 = vpop.permute.xlu0 %1062
    %v1065 = vadd.f32 %v1055, %v1063
    %v1066 = vtanh.pop %v1065
    %1068 = vrot.lane.b32.xlu0 %v1066, 32
    %v1069 = vpop.permute.xlu0 %1068
    %v1071 = vmul.f32 %v1053, %v1069
    %v1072 = vpack.c.bf16 %v1005, %v1005
    %v1074 = vrot.slane %v1072, 1
    %1075 = vrot.lane.b32.xlu0 %v1074, 64
    %v1076 = vpop.permute.xlu0 %1075
    %v1078 = vsel %vm244, %v1076, 0
    %1080 = vmatpush.bf16.msra.mxu0 0
    %1081 = vmatpush.bf16.msra.mxu0 0
    %1082 = vmatpush.bf16.msra.mxu0 0
    %1083 = vmatpush.bf16.msra.mxu0 0
    %1084 = vmatpush.bf16.msra.mxu0 0
    %1085 = vmatpush.bf16.msra.mxu0 0
    %1086 = vmatpush.bf16.msra.mxu0 %v271
    %1087 = vmatpush.bf16.msra.mxu0 %v270
    %1088 = vmatmul.bf16.gmra.mxu0 %v1078
    %v1089 = vpop.f32.mrf.mxu0
    %v1090 = vadd.f32 0.0, %v1089
    %v1091 = vpop.f32.mrf.mxu0
    %1092 = vdwg.mxu0
    %v1094 = vrot.slane %v1090, 4
    %v1096 = vadd.f32 %v260, %v1094
    %v1097 = vadd.f32 %v1096, %v572
    %v1098 = vxor.u32 %v1097, 2147483648
    %v1099 = vmul.f32 %v1098, 1.442695
    %v1100 = vpow.pop %v1099
    %v1101 = vadd.f32 %v1100, 1.0
    %v1102 = vrcp.pop %v1101
    %v1103 = vmul.f32 %v1101, %v1102
    %v1104 = vsub.f32 1.0, %v1103
    %v1105 = vmul.f32 %v1102, %v1104
    %v1106 = vadd.f32 %v1102, %v1105
    %vm1107 = vweird.f32 %v1101
    %vm1108 = vweird.f32 %v1102
    %vm1109 = vmor %vm1107, %vm1108
    %v1110 = vsel %vm1109, %v1102, %v1106
    %v1111 = vand.u32 2147483647, %v1101
    %vm1112 = vcmp.eq.f32.partialorder %v1111, 8.507059e+37
    %v1113 = vand.u32 %v1101, 2147483648
    %v1114 = vor.u32 1.1754944e-38, %v1113
    %v1115 = vsel %vm1112, %v1114, %v1110
    %v1116 = vmul.f32 1.0, %v1115
    %v1117 = vtanh.pop %v1097
    %v1119 = vrot.slane %v999, 6
    %v1121 = vmul.f32 %v1116, %v1119
    %1123 = vrot.lane.b32.xlu0 %v1117, 32
    %v1124 = vpop.permute.xlu0 %1123
    %v1126 = vmul.f32 %v1116, %v1124
    %1128 = vrot.lane.b32.xlu0 %v1126, 32
    %v1129 = vpop.permute.xlu0 %1128
    %v1131 = vadd.f32 %v1121, %v1129
    %v1132 = vtanh.pop %v1131
    %1134 = vrot.lane.b32.xlu0 %v1132, 32
    %v1135 = vpop.permute.xlu0 %1134
    %v1137 = vmul.f32 %v1116, %v1135
    %1139 = vrot.lane.b32.xlu0 %v1137, 64
    %v1140 = vpop.permute.xlu0 %1139
    %v1143 = vrot.slane %v1071, 4
    %1144 = vrot.lane.b32.xlu0 %v1143, 96
    %v1145 = vpop.permute.xlu0 %1144
    %v1147 = vsel %vm244, %v1140, %v1145
    %v1148 = vpack.c.bf16 %v1147, %v1147
    %v1150 = vrot.slane %v1148, 2
    %v1152 = vsel %vm359, %v1150, 0
    %1154 = vmatpush.bf16.msra.mxu0 0
    %1155 = vmatpush.bf16.msra.mxu0 0
    %1156 = vmatpush.bf16.msra.mxu0 0
    %1157 = vmatpush.bf16.msra.mxu0 0
    %1158 = vmatpush.bf16.msra.mxu0 %v354
    %1159 = vmatpush.bf16.msra.mxu0 %v353
    %1160 = vmatpush.bf16.msra.mxu0 %v352
    %1161 = vmatpush.bf16.msra.mxu0 %v351
    %1162 = vmatmul.bf16.gmra.mxu0 %v1152
    %v1163 = vpop.f32.mrf.mxu0
    %v1164 = vadd.f32 %v192, %v1163
    %v1165 = vpop.f32.mrf.mxu0
    %1166 = vdwg.mxu0
    %v1167 = vxor.u32 %v1164, 2147483648
    %v1168 = vmul.f32 %v1167, 1.442695
    %v1169 = vpow.pop %v1168
    %v1170 = vadd.f32 %v1169, 1.0
    %v1171 = vrcp.pop %v1170
    %v1172 = vmul.f32 %v1170, %v1171
    %v1173 = vsub.f32 1.0, %v1172
    %v1174 = vmul.f32 %v1171, %v1173
    %v1175 = vadd.f32 %v1171, %v1174
    %vm1176 = vweird.f32 %v1170
    %vm1177 = vweird.f32 %v1171
    %vm1178 = vmor %vm1176, %vm1177
    %v1179 = vsel %vm1178, %v1171, %v1175
    %v1180 = vand.u32 2147483647, %v1170
    %vm1181 = vcmp.eq.f32.partialorder %v1180, 8.507059e+37
    %v1182 = vand.u32 %v1170, 2147483648
    %v1183 = vor.u32 1.1754944e-38, %v1182
    %v1184 = vsel %vm1181, %v1183, %v1179
    %v1185 = vmul.f32 1.0, %v1184
    %v1186 = vtanh.pop %v1164
    %v1187 = vmul.f32 %v1185, %v1065
    %1189 = vrot.lane.b32.xlu0 %v1186, 32
    %v1190 = vpop.permute.xlu0 %1189
    %v1192 = vmul.f32 %v1185, %v1190
    %1194 = vrot.lane.b32.xlu0 %v1192, 32
    %v1195 = vpop.permute.xlu0 %1194
    %v1197 = vadd.f32 %v1187, %v1195
    %v1198 = vtanh.pop %v1197
    %1200 = vrot.lane.b32.xlu0 %v1198, 32
    %v1201 = vpop.permute.xlu0 %1200
    %v1203 = vmul.f32 %v1185, %v1201
    %v1204 = vpack.c.bf16 %v1137, %v1137
    %v1206 = vrot.slane %v1204, 2
    %1207 = vrot.lane.b32.xlu0 %v1206, 64
    %v1208 = vpop.permute.xlu0 %1207
    %v1210 = vsel %vm244, %v1208, 0
    %1212 = vmatpush.bf16.msra.mxu0 0
    %1213 = vmatpush.bf16.msra.mxu0 0
    %1214 = vmatpush.bf16.msra.mxu0 0
    %1215 = vmatpush.bf16.msra.mxu0 0
    %1216 = vmatpush.bf16.msra.mxu0 0
    %1217 = vmatpush.bf16.msra.mxu0 0
    %1218 = vmatpush.bf16.msra.mxu0 %v271
    %1219 = vmatpush.bf16.msra.mxu0 %v270
    %1220 = vmatmul.bf16.gmra.mxu0 %v1210
    %v1221 = vpop.f32.mrf.mxu0
    %v1222 = vadd.f32 0.0, %v1221
    %v1223 = vpop.f32.mrf.mxu0
    %1224 = vdwg.mxu0
    %v1226 = vrot.slane %v1222, 2
    %v1228 = vadd.f32 %v260, %v1226
    %v1229 = vadd.f32 %v1228, %v706
    %v1230 = vxor.u32 %v1229, 2147483648
    %v1231 = vmul.f32 %v1230, 1.442695
    %v1232 = vpow.pop %v1231
    %v1233 = vadd.f32 %v1232, 1.0
    %v1234 = vrcp.pop %v1233
    %v1235 = vmul.f32 %v1233, %v1234
    %v1236 = vsub.f32 1.0, %v1235
    %v1237 = vmul.f32 %v1234, %v1236
    %v1238 = vadd.f32 %v1234, %v1237
    %vm1239 = vweird.f32 %v1233
    %vm1240 = vweird.f32 %v1234
    %vm1241 = vmor %vm1239, %vm1240
    %v1242 = vsel %vm1241, %v1234, %v1238
    %v1243 = vand.u32 2147483647, %v1233
    %vm1244 = vcmp.eq.f32.partialorder %v1243, 8.507059e+37
    %v1245 = vand.u32 %v1233, 2147483648
    %v1246 = vor.u32 1.1754944e-38, %v1245
    %v1247 = vsel %vm1244, %v1246, %v1242
    %v1248 = vmul.f32 1.0, %v1247
    %v1249 = vtanh.pop %v1229
    %v1251 = vrot.slane %v1131, 6
    %v1253 = vmul.f32 %v1248, %v1251
    %1255 = vrot.lane.b32.xlu0 %v1249, 32
    %v1256 = vpop.permute.xlu0 %1255
    %v1258 = vmul.f32 %v1248, %v1256
    %1260 = vrot.lane.b32.xlu0 %v1258, 32
    %v1261 = vpop.permute.xlu0 %1260
    %v1263 = vadd.f32 %v1253, %v1261
    %v1264 = vtanh.pop %v1263
    %1266 = vrot.lane.b32.xlu0 %v1264, 32
    %v1267 = vpop.permute.xlu0 %1266
    %v1269 = vmul.f32 %v1248, %v1267
    %1271 = vrot.lane.b32.xlu0 %v1269, 64
    %v1272 = vpop.permute.xlu0 %1271
    %v1275 = vrot.slane %v1203, 2
    %1276 = vrot.lane.b32.xlu0 %v1275, 96
    %v1277 = vpop.permute.xlu0 %1276
    %v1279 = vsel %vm244, %v1272, %v1277
    %v1280 = vpack.c.bf16 %v1279, %v1279
    %v1282 = vrot.slane %v1280, 3
    %v1284 = vsel %vm359, %v1282, 0
    %1286 = vmatpush.bf16.msra.mxu0 0
    %1287 = vmatpush.bf16.msra.mxu0 0
    %1288 = vmatpush.bf16.msra.mxu0 0
    %1289 = vmatpush.bf16.msra.mxu0 0
    %1290 = vmatpush.bf16.msra.mxu0 %v354
    %1291 = vmatpush.bf16.msra.mxu0 %v353
    %1292 = vmatpush.bf16.msra.mxu0 %v352
    %1293 = vmatpush.bf16.msra.mxu0 %v351
    %1294 = vmatmul.bf16.gmra.mxu0 %v1284
    %v1295 = vpop.f32.mrf.mxu0
    %v1296 = vadd.f32 %v192, %v1295
    %v1297 = vpop.f32.mrf.mxu0
    %1298 = vdwg.mxu0
    %v1299 = vxor.u32 %v1296, 2147483648
    %v1300 = vmul.f32 %v1299, 1.442695
    %v1301 = vpow.pop %v1300
    %v1302 = vadd.f32 %v1301, 1.0
    %v1303 = vrcp.pop %v1302
    %v1304 = vmul.f32 %v1302, %v1303
    %v1305 = vsub.f32 1.0, %v1304
    %v1306 = vmul.f32 %v1303, %v1305
    %v1307 = vadd.f32 %v1303, %v1306
    %vm1308 = vweird.f32 %v1302
    %vm1309 = vweird.f32 %v1303
    %vm1310 = vmor %vm1308, %vm1309
    %v1311 = vsel %vm1310, %v1303, %v1307
    %v1312 = vand.u32 2147483647, %v1302
    %vm1313 = vcmp.eq.f32.partialorder %v1312, 8.507059e+37
    %v1314 = vand.u32 %v1302, 2147483648
    %v1315 = vor.u32 1.1754944e-38, %v1314
    %v1316 = vsel %vm1313, %v1315, %v1311
    %v1317 = vmul.f32 1.0, %v1316
    %v1318 = vtanh.pop %v1296
    %v1319 = vmul.f32 %v1317, %v1197
    %1321 = vrot.lane.b32.xlu0 %v1318, 32
    %v1322 = vpop.permute.xlu0 %1321
    %v1324 = vmul.f32 %v1317, %v1322
    %1326 = vrot.lane.b32.xlu0 %v1324, 32
    %v1327 = vpop.permute.xlu0 %1326
    %v1329 = vadd.f32 %v1319, %v1327
    %v1330 = vtanh.pop %v1329
    %1332 = vrot.lane.b32.xlu0 %v1330, 32
    %v1333 = vpop.permute.xlu0 %1332
    %v1335 = vmul.f32 %v1317, %v1333
    %v1336 = vpack.c.bf16 %v1335, %v1335
    %1337 = vrot.lane.b32.xlu0 %v412, 64
    %v1338 = vpop.permute.xlu0 %1337
    %v1340 = vrot.slane %v412, 1
    %1341 = vrot.lane.b32.xlu0 %v1340, 96
    %v1342 = vpop.permute.xlu0 %1341
    %v1344 = vsel %vm244, %v1338, %v1342
    %1345 = vrot.lane.b32.xlu0 %v546, 64
    %v1346 = vpop.permute.xlu0 %1345
    %v1348 = vrot.slane %v546, 1
    %1349 = vrot.lane.b32.xlu0 %v1348, 96
    %v1350 = vpop.permute.xlu0 %1349
    %v1352 = vsel %vm244, %v1346, %v1350
    %1353 = vrot.lane.b32.xlu0 %v680, 64
    %v1354 = vpop.permute.xlu0 %1353
    %v1356 = vrot.slane %v680, 1
    %1357 = vrot.lane.b32.xlu0 %v1356, 96
    %v1358 = vpop.permute.xlu0 %1357
    %v1360 = vsel %vm244, %v1354, %v1358
    %1361 = vrot.lane.b32.xlu0 %v814, 64
    %v1362 = vpop.permute.xlu0 %1361
    %v1364 = vrot.slane %v814, 1
    %1365 = vrot.lane.b32.xlu0 %v1364, 96
    %v1366 = vpop.permute.xlu0 %1365
    %v1368 = vsel %vm244, %v1362, %v1366
    %1369 = vrot.lane.b32.xlu0 %v940, 64
    %v1370 = vpop.permute.xlu0 %1369
    %v1372 = vrot.slane %v940, 1
    %1373 = vrot.lane.b32.xlu0 %v1372, 96
    %v1374 = vpop.permute.xlu0 %1373
    %v1376 = vsel %vm244, %v1370, %v1374
    %1377 = vrot.lane.b32.xlu0 %v1071, 64
    %v1378 = vpop.permute.xlu0 %1377
    %v1380 = vrot.slane %v1071, 1
    %1381 = vrot.lane.b32.xlu0 %v1380, 96
    %v1382 = vpop.permute.xlu0 %1381
    %v1384 = vsel %vm244, %v1378, %v1382
    %1385 = vrot.lane.b32.xlu0 %v1203, 64
    %v1386 = vpop.permute.xlu0 %1385
    %v1388 = vrot.slane %v1203, 1
    %1389 = vrot.lane.b32.xlu0 %v1388, 96
    %v1390 = vpop.permute.xlu0 %1389
    %v1392 = vsel %vm244, %v1386, %v1390
    %v1394 = vrot.slane %v1352, 7
    %v1397 = vrot.slane %v1360, 6
    %v1400 = vrot.slane %v1368, 5
    %v1403 = vrot.slane %v1376, 4
    %v1406 = vrot.slane %v1384, 3
    %v1409 = vrot.slane %v1392, 2
    %vm1411 = vcmask 1040384
    %v1412 = vsel %vm1411, %v1344, %v1394
    %v1413 = vsel %vm207, %v1412, %v1397
    %vm1414 = vcmask 1042432
    %v1415 = vsel %vm1414, %v1413, %v1400
    %vm1416 = vcmask 1043456
    %v1417 = vsel %vm1416, %v1415, %v1403
    %vm1418 = vcmask 1044480
    %v1419 = vsel %vm1418, %v1417, %v1406
    %vm1420 = vcmask 1045504
    %v1421 = vsel %vm1420, %v1419, %v1409
    %v1422 = vmax.f32 %v1421, 0.0
    %v1423 = vld [vmem:[%s8] sm:$0xf]
    %v1424 = vld [vmem:[%s8 + $0x4] sm:$0xf]
    %v1425 = vld [vmem:[%s8 + $0x8] sm:$0xf]
    %v1426 = vld [vmem:[%s8 + $0xc] sm:$0xf]
    %v1427 = vpack.c.bf16 %v1422, %v1422
    %v1428 = vld [vmem:[#allocation10] sm:$0xff]
    %v1429 = vld [vmem:[#allocation10 + $0x8] sm:$0xff]
    %v1430 = vld [vmem:[#allocation10 + $0x10] sm:$0xff]
    %v1431 = vld [vmem:[#allocation10 + $0x18] sm:$0xff]
    %v1436 = vunpack.c.l.b16 %v1423
    %v1437 = vunpack.c.l.b16 %v1424
    %v1438 = vunpack.c.l.b16 %v1425
    %v1439 = vunpack.c.l.b16 %v1426
    %v1440 = vpack.c.b16 %v1437, %v1436
    %v1441 = vpack.c.b16 %v1439, %v1438
    %vm1442 = vcmask 56320
    %v1444 = vsel %vm1442, %v1440, 0
    %v1447 = vsel %vm1442, %v1441, 0
    %v1449 = vsel %vm1414, 4294967295, 65535
    %v1450 = vsel %vm1416, %v1449, 0
    %v1452 = vand.u32 %v1427, %v1450
    %1454 = vmatpush.bf16.msra.mxu0 0
    %1455 = vmatpush.bf16.msra.mxu0 0
    %1456 = vmatpush.bf16.msra.mxu0 0
    %1457 = vmatpush.bf16.msra.mxu0 0
    %1458 = vmatpush.bf16.msra.mxu0 0
    %1459 = vmatpush.bf16.msra.mxu0 0
    %1460 = vmatpush.bf16.msra.mxu0 0
    %1461 = vmatpush.bf16.msra.mxu0 %v1452
    %1462 = vmatmul.bf16.gmra.mxu0 %v1444
    %v1463 = vpop.f32.mrf.mxu0
    %v1464 = vadd.f32 %v1428, %v1463
    %v1465 = vpop.f32.mrf.mxu0
    %v1466 = vadd.f32 %v1429, %v1465
    %1467 = vmatmul.bf16.gmra.mxu0 %v1447
    %v1468 = vpop.f32.mrf.mxu0
    %v1469 = vadd.f32 %v1430, %v1468
    %v1470 = vpop.f32.mrf.mxu0
    %v1471 = vadd.f32 %v1431, %v1470
    %1472 = vdwg.mxu0
    %v1473 = vmax.f32 %v1464, 0.0
    %v1474 = vmax.f32 %v1466, 0.0
    %v1475 = vmax.f32 %v1469, 0.0
    %v1476 = vmax.f32 %v1471, 0.0
    %v1477 = vld [vmem:[#allocation11] sm:$0xf]
    %v1478 = vld [vmem:[#allocation11 + $0x4] sm:$0xf]
    %v1479 = vld [vmem:[#allocation11 + $0x8] sm:$0xf]
    %v1480 = vld [vmem:[#allocation11 + $0xc] sm:$0xf]
    %v1481 = vld [vmem:[#allocation13] sm:$0x3]
    %1483 = vrot.lane.b32.xlu0 %v1336, 64
    %v1484 = vpop.permute.xlu0 %1483
    %v1489 = vunpack.c.l.b16 %v1477
    %v1490 = vunpack.c.l.b16 %v1478
    %v1491 = vunpack.c.l.b16 %v1479
    %v1492 = vunpack.c.l.b16 %v1480
    %v1493 = vpack.c.b16 %v1490, %v1489
    %v1494 = vpack.c.b16 %v1492, %v1491
    %v1498 = vsel %vm244, %v1484, 0
    %1500 = vmatpush.bf16.msra.mxu0 0
    %1501 = vmatpush.bf16.msra.mxu0 0
    %1502 = vmatpush.bf16.msra.mxu0 0
    %1503 = vmatpush.bf16.msra.mxu0 0
    %1504 = vmatpush.bf16.msra.mxu0 0
    %1505 = vmatpush.bf16.msra.mxu0 0
    %1506 = vmatpush.bf16.msra.mxu0 %v1494
    %1507 = vmatpush.bf16.msra.mxu0 %v1493
    %1508 = vmatmul.bf16.gmra.mxu0 %v1498
    %v1509 = vpop.f32.mrf.mxu0
    %v1510 = vadd.f32 %v1481, %v1509
    %v1511 = vpop.f32.mrf.mxu0
    %1512 = vdwg.mxu0
    %v1513 = vperm.slane %v1510, 0
    %v1514 = vmul.f32 %v1473, %v1513
    %v1515 = vmul.f32 %v1474, %v1513
    %v1516 = vmul.f32 %v1475, %v1513
    %v1517 = vmul.f32 %v1476, %v1513
    %v1518 = vsel %vm244, %v1514, 0.0
    %1519 = vadd.xlane.f32.xlu0 %v1518
    %v1520 = vpop.xlane.xlu0 %1519
    %v1521 = vsel %vm244, %v1515, 0.0
    %1522 = vadd.xlane.f32.xlu0 %v1521
    %v1523 = vpop.xlane.xlu0 %1522
    %v1524 = vsel %vm244, %v1516, 0.0
    %1525 = vadd.xlane.f32.xlu0 %v1524
    %v1526 = vpop.xlane.xlu0 %1525
    %v1527 = vsel %vm244, %v1517, 0.0
    %1528 = vadd.xlane.f32.xlu0 %v1527
    %v1529 = vpop.xlane.xlu0 %1528
    %v1530 = vxor.u32 %v1520, 2147483648
    %v1531 = vxor.u32 %v1523, 2147483648
    %v1532 = vxor.u32 %v1526, 2147483648
    %v1533 = vxor.u32 %v1529, 2147483648
    %v1534 = vmul.f32 %v1530, 1.442695
    %v1535 = vpow.pop %v1534
    %v1536 = vmul.f32 %v1531, 1.442695
    %v1537 = vpow.pop %v1536
    %v1538 = vmul.f32 %v1532, 1.442695
    %v1539 = vpow.pop %v1538
    %v1540 = vmul.f32 %v1533, 1.442695
    %v1541 = vpow.pop %v1540
    %v1542 = vadd.f32 %v1535, 1.0
    %v1543 = vadd.f32 %v1537, 1.0
    %v1544 = vadd.f32 %v1539, 1.0
    %v1545 = vadd.f32 %v1541, 1.0
    %v1546 = vrcp.pop %v1542
    %v1547 = vmul.f32 %v1542, %v1546
    %v1548 = vsub.f32 1.0, %v1547
    %v1549 = vmul.f32 %v1546, %v1548
    %v1550 = vadd.f32 %v1546, %v1549
    %vm1551 = vweird.f32 %v1542
    %vm1552 = vweird.f32 %v1546
    %vm1553 = vmor %vm1551, %vm1552
    %v1554 = vsel %vm1553, %v1546, %v1550
    %v1555 = vand.u32 2147483647, %v1542
    %vm1556 = vcmp.eq.f32.partialorder %v1555, 8.507059e+37
    %v1557 = vand.u32 %v1542, 2147483648
    %v1558 = vor.u32 1.1754944e-38, %v1557
    %v1559 = vsel %vm1556, %v1558, %v1554
    %v1560 = vmul.f32 1.0, %v1559
    %v1561 = vrcp.pop %v1543
    %v1562 = vmul.f32 %v1543, %v1561
    %v1563 = vsub.f32 1.0, %v1562
    %v1564 = vmul.f32 %v1561, %v1563
    %v1565 = vadd.f32 %v1561, %v1564
    %vm1566 = vweird.f32 %v1543
    %vm1567 = vweird.f32 %v1561
    %vm1568 = vmor %vm1566, %vm1567
    %v1569 = vsel %vm1568, %v1561, %v1565
    %v1570 = vand.u32 2147483647, %v1543
    %vm1571 = vcmp.eq.f32.partialorder %v1570, 8.507059e+37
    %v1572 = vand.u32 %v1543, 2147483648
    %v1573 = vor.u32 1.1754944e-38, %v1572
    %v1574 = vsel %vm1571, %v1573, %v1569
    %v1575 = vmul.f32 1.0, %v1574
    %v1576 = vrcp.pop %v1544
    %v1577 = vmul.f32 %v1544, %v1576
    %v1578 = vsub.f32 1.0, %v1577
    %v1579 = vmul.f32 %v1576, %v1578
    %v1580 = vadd.f32 %v1576, %v1579
    %vm1581 = vweird.f32 %v1544
    %vm1582 = vweird.f32 %v1576
    %vm1583 = vmor %vm1581, %vm1582
    %v1584 = vsel %vm1583, %v1576, %v1580
    %v1585 = vand.u32 2147483647, %v1544
    %vm1586 = vcmp.eq.f32.partialorder %v1585, 8.507059e+37
    %v1587 = vand.u32 %v1544, 2147483648
    %v1588 = vor.u32 1.1754944e-38, %v1587
    %v1589 = vsel %vm1586, %v1588, %v1584
    %v1590 = vmul.f32 1.0, %v1589
    %v1591 = vrcp.pop %v1545
    %v1592 = vmul.f32 %v1545, %v1591
    %v1593 = vsub.f32 1.0, %v1592
    %v1594 = vmul.f32 %v1591, %v1593
    %v1595 = vadd.f32 %v1591, %v1594
    %vm1596 = vweird.f32 %v1545
    %vm1597 = vweird.f32 %v1591
    %vm1598 = vmor %vm1596, %vm1597
    %v1599 = vsel %vm1598, %v1591, %v1595
    %v1600 = vand.u32 2147483647, %v1545
    %vm1601 = vcmp.eq.f32.partialorder %v1600, 8.507059e+37
    %v1602 = vand.u32 %v1545, 2147483648
    %v1603 = vor.u32 1.1754944e-38, %v1602
    %v1604 = vsel %vm1601, %v1603, %v1599
    %v1605 = vmul.f32 1.0, %v1604
    %v1606 = vmul.f32 %v1560, %v1473
    %v1607 = vmul.f32 %v1575, %v1474
    %v1608 = vmul.f32 %v1590, %v1475
    %v1609 = vmul.f32 %v1605, %v1476
    %v1610 = vsel %vm244, %v1606, 0.0
    %v1611 = vsel %vm244, %v1607, 0.0
    %v1612 = vadd.f32 %v1610, %v1611
    %v1613 = vsel %vm244, %v1608, 0.0
    %v1614 = vadd.f32 %v1612, %v1613
    %v1615 = vsel %vm244, %v1609, 0.0
    %v1616 = vadd.f32 %v1614, %v1615
    %v1617 = vrot.slane %v1616, 4
    %v1618 = vadd.f32 %v1616, %v1617
    %v1619 = vrot.slane %v1618, 2
    %v1620 = vadd.f32 %v1618, %v1619
    %v1621 = vrot.slane %v1620, 1
    %v1622 = vadd.f32 %v1620, %v1621
    %v1623 = vperm.slane %v1510, 1
    %1625 = vrot.lane.b32.xlu0 %v1623, 32
    %v1626 = vpop.permute.xlu0 %1625
    %v1628 = vmul.f32 %v1473, %v1626
    %v1629 = vmul.f32 %v1474, %v1626
    %v1630 = vmul.f32 %v1475, %v1626
    %v1631 = vmul.f32 %v1476, %v1626
    %1636 = vrot.lane.b32.xlu0 %v1628, 96
    %v1637 = vpop.permute.xlu0 %1636
    %1638 = vrot.lane.b32.xlu0 %v1629, 96
    %v1639 = vpop.permute.xlu0 %1638
    %1640 = vrot.lane.b32.xlu0 %v1630, 96
    %v1641 = vpop.permute.xlu0 %1640
    %1642 = vrot.lane.b32.xlu0 %v1631, 96
    %v1643 = vpop.permute.xlu0 %1642
    %v1648 = vsel %vm244, %v1637, 0.0
    %1649 = vadd.xlane.f32.xlu0 %v1648
    %v1650 = vpop.xlane.xlu0 %1649
    %v1651 = vsel %vm244, %v1639, 0.0
    %1652 = vadd.xlane.f32.xlu0 %v1651
    %v1653 = vpop.xlane.xlu0 %1652
    %v1654 = vsel %vm244, %v1641, 0.0
    %1655 = vadd.xlane.f32.xlu0 %v1654
    %v1656 = vpop.xlane.xlu0 %1655
    %v1657 = vsel %vm244, %v1643, 0.0
    %1658 = vadd.xlane.f32.xlu0 %v1657
    %v1659 = vpop.xlane.xlu0 %1658
    %v1660 = vxor.u32 %v1650, 2147483648
    %v1661 = vxor.u32 %v1653, 2147483648
    %v1662 = vxor.u32 %v1656, 2147483648
    %v1663 = vxor.u32 %v1659, 2147483648
    %v1664 = vmul.f32 %v1660, 1.442695
    %v1665 = vpow.pop %v1664
    %v1666 = vmul.f32 %v1661, 1.442695
    %v1667 = vpow.pop %v1666
    %v1668 = vmul.f32 %v1662, 1.442695
    %v1669 = vpow.pop %v1668
    %v1670 = vmul.f32 %v1663, 1.442695
    %v1671 = vpow.pop %v1670
    %v1672 = vadd.f32 %v1665, 1.0
    %v1673 = vadd.f32 %v1667, 1.0
    %v1674 = vadd.f32 %v1669, 1.0
    %v1675 = vadd.f32 %v1671, 1.0
    %v1676 = vrcp.pop %v1672
    %v1677 = vmul.f32 %v1672, %v1676
    %v1678 = vsub.f32 1.0, %v1677
    %v1679 = vmul.f32 %v1676, %v1678
    %v1680 = vadd.f32 %v1676, %v1679
    %vm1681 = vweird.f32 %v1672
    %vm1682 = vweird.f32 %v1676
    %vm1683 = vmor %vm1681, %vm1682
    %v1684 = vsel %vm1683, %v1676, %v1680
    %v1685 = vand.u32 2147483647, %v1672
    %vm1686 = vcmp.eq.f32.partialorder %v1685, 8.507059e+37
    %v1687 = vand.u32 %v1672, 2147483648
    %v1688 = vor.u32 1.1754944e-38, %v1687
    %v1689 = vsel %vm1686, %v1688, %v1684
    %v1690 = vmul.f32 1.0, %v1689
    %v1691 = vrcp.pop %v1673
    %v1692 = vmul.f32 %v1673, %v1691
    %v1693 = vsub.f32 1.0, %v1692
    %v1694 = vmul.f32 %v1691, %v1693
    %v1695 = vadd.f32 %v1691, %v1694
    %vm1696 = vweird.f32 %v1673
    %vm1697 = vweird.f32 %v1691
    %vm1698 = vmor %vm1696, %vm1697
    %v1699 = vsel %vm1698, %v1691, %v1695
    %v1700 = vand.u32 2147483647, %v1673
    %vm1701 = vcmp.eq.f32.partialorder %v1700, 8.507059e+37
    %v1702 = vand.u32 %v1673, 2147483648
    %v1703 = vor.u32 1.1754944e-38, %v1702
    %v1704 = vsel %vm1701, %v1703, %v1699
    %v1705 = vmul.f32 1.0, %v1704
    %v1706 = vrcp.pop %v1674
    %v1707 = vmul.f32 %v1674, %v1706
    %v1708 = vsub.f32 1.0, %v1707
    %v1709 = vmul.f32 %v1706, %v1708
    %v1710 = vadd.f32 %v1706, %v1709
    %vm1711 = vweird.f32 %v1674
    %vm1712 = vweird.f32 %v1706
    %vm1713 = vmor %vm1711, %vm1712
    %v1714 = vsel %vm1713, %v1706, %v1710
    %v1715 = vand.u32 2147483647, %v1674
    %vm1716 = vcmp.eq.f32.partialorder %v1715, 8.507059e+37
    %v1717 = vand.u32 %v1674, 2147483648
    %v1718 = vor.u32 1.1754944e-38, %v1717
    %v1719 = vsel %vm1716, %v1718, %v1714
    %v1720 = vmul.f32 1.0, %v1719
    %v1721 = vrcp.pop %v1675
    %v1722 = vmul.f32 %v1675, %v1721
    %v1723 = vsub.f32 1.0, %v1722
    %v1724 = vmul.f32 %v1721, %v1723
    %v1725 = vadd.f32 %v1721, %v1724
    %vm1726 = vweird.f32 %v1675
    %vm1727 = vweird.f32 %v1721
    %vm1728 = vmor %vm1726, %vm1727
    %v1729 = vsel %vm1728, %v1721, %v1725
    %v1730 = vand.u32 2147483647, %v1675
    %vm1731 = vcmp.eq.f32.partialorder %v1730, 8.507059e+37
    %v1732 = vand.u32 %v1675, 2147483648
    %v1733 = vor.u32 1.1754944e-38, %v1732
    %v1734 = vsel %vm1731, %v1733, %v1729
    %v1735 = vmul.f32 1.0, %v1734
    %v1736 = vmul.f32 %v1690, %v1473
    %v1737 = vmul.f32 %v1705, %v1474
    %v1738 = vmul.f32 %v1720, %v1475
    %v1739 = vmul.f32 %v1735, %v1476
    %vm1740 = vcmask 523520
    %v1741 = vsel %vm1740, %v1736, 0.0
    %v1742 = vsel %vm1740, %v1737, 0.0
    %v1743 = vadd.f32 %v1741, %v1742
    %v1744 = vsel %vm1740, %v1738, 0.0
    %v1745 = vadd.f32 %v1743, %v1744
    %v1746 = vsel %vm1740, %v1739, 0.0
    %v1747 = vadd.f32 %v1745, %v1746
    %v1748 = vrot.slane %v1747, 4
    %v1749 = vadd.f32 %v1747, %v1748
    %v1750 = vrot.slane %v1749, 2
    %v1751 = vadd.f32 %v1749, %v1750
    %v1752 = vrot.slane %v1751, 1
    %v1753 = vadd.f32 %v1751, %v1752
    %1755 = vrot.lane.b32.xlu0 %v1753, 96
    %v1756 = vpop.permute.xlu0 %1755
    %v1758 = vsel %vm1411, %v1622, %v1756
    %v1759 = vld [vmem:[%s12] sm:$0xf]
    %v1760 = vld [vmem:[%s12 + $0x4] sm:$0xf]
    %v1761 = vld [vmem:[%s12 + $0x8] sm:$0xf]
    %v1762 = vld [vmem:[%s12 + $0xc] sm:$0xf]
    %v1763 = vpack.c.bf16 %v1758, %v1758
    %v1764 = vld [vmem:[#allocation14] sm:$0xf]
    %v1765 = vld [vmem:[#allocation14 + $0x4] sm:$0xf]
    %v1766 = vld [vmem:[#allocation14 + $0x8] sm:$0xf]
    %v1767 = vld [vmem:[#allocation14 + $0xc] sm:$0xf]
    %v1772 = vunpack.c.l.b16 %v1764
    %v1773 = vunpack.c.l.b16 %v1765
    %v1774 = vunpack.c.l.b16 %v1766
    %v1775 = vunpack.c.l.b16 %v1767
    %v1776 = vpack.c.b16 %v1773, %v1772
    %v1777 = vpack.c.b16 %v1775, %v1774
    %v1781 = vsel %vm244, %v1763, 0
    %1783 = vmatpush.bf16.msra.mxu0 0
    %1784 = vmatpush.bf16.msra.mxu0 0
    %1785 = vmatpush.bf16.msra.mxu0 0
    %1786 = vmatpush.bf16.msra.mxu0 0
    %1787 = vmatpush.bf16.msra.mxu0 0
    %1788 = vmatpush.bf16.msra.mxu0 0
    %1789 = vmatpush.bf16.msra.mxu0 %v1777
    %1790 = vmatpush.bf16.msra.mxu0 %v1776
    %1791 = vmatmul.bf16.gmra.mxu0 %v1781
    %v1792 = vpop.f32.mrf.mxu0
    %v1793 = vadd.f32 0.0, %v1792
    %v1794 = vpop.f32.mrf.mxu0
    %1795 = vdwg.mxu0
    %v1800 = vunpack.c.l.b16 %v1759
    %v1801 = vunpack.c.l.b16 %v1760
    %v1802 = vunpack.c.l.b16 %v1761
    %v1803 = vunpack.c.l.b16 %v1762
    %v1804 = vpack.c.b16 %v1801, %v1800
    %v1805 = vpack.c.b16 %v1803, %v1802
    %1808 = vmatpush.bf16.msra.mxu0 0
    %1809 = vmatpush.bf16.msra.mxu0 0
    %1810 = vmatpush.bf16.msra.mxu0 0
    %1811 = vmatpush.bf16.msra.mxu0 0
    %1812 = vmatpush.bf16.msra.mxu0 0
    %1813 = vmatpush.bf16.msra.mxu0 0
    %1814 = vmatpush.bf16.msra.mxu0 %v1805
    %1815 = vmatpush.bf16.msra.mxu0 %v1804
    %1816 = vmatmul.bf16.gmra.mxu0 %v1498
    %v1817 = vpop.f32.mrf.mxu0
    %v1818 = vadd.f32 %v1793, %v1817
    %v1819 = vpop.f32.mrf.mxu0
    %1820 = vdwg.mxu0
    %v1821 = vld [vmem:[%s14] sm:$0x3]
    %v1822 = vadd.f32 %v1818, %v1821
    %v1823 = vpack.c.bf16 %v1822, %v1822
    %v1824 = vld [vmem:[%s15] sm:$0xf]
    %v1825 = vld [vmem:[%s15 + $0x4] sm:$0xf]
    %v1826 = vld [vmem:[%s15 + $0x8] sm:$0xf]
    %v1827 = vld [vmem:[%s15 + $0xc] sm:$0xf]
    %v1828 = vld [vmem:[%s16] sm:$0x3]
    %v1833 = vunpack.c.l.b16 %v1824
    %v1834 = vunpack.c.l.b16 %v1825
    %v1835 = vunpack.c.l.b16 %v1826
    %v1836 = vunpack.c.l.b16 %v1827
    %v1837 = vpack.c.b16 %v1834, %v1833
    %v1838 = vpack.c.b16 %v1836, %v1835
    %v1842 = vsel %vm244, %v1823, 0
    %1844 = vmatpush.bf16.msra.mxu0 0
    %1845 = vmatpush.bf16.msra.mxu0 0
    %1846 = vmatpush.bf16.msra.mxu0 0
    %1847 = vmatpush.bf16.msra.mxu0 0
    %1848 = vmatpush.bf16.msra.mxu0 0
    %1849 = vmatpush.bf16.msra.mxu0 0
    %1850 = vmatpush.bf16.msra.mxu0 %v1838
    %1851 = vmatpush.bf16.msra.mxu0 %v1837
    %1852 = vmatmul.bf16.gmra.mxu0 %v1842
    %v1853 = vpop.f32.mrf.mxu0
    %v1854 = vadd.f32 %v1828, %v1853
    %v1855 = vpop.f32.mrf.mxu0
    %1856 = vdwg.mxu0
    %vm1857 = vcmask 25600
    %1858 = vst.msk [vmem:[#allocation16] sm:$0x3] %vm1857, %v1854
    // Predicated region
    $region102: #{tpu_custom_call.1} parent=1 // pred_check
      _
    $region103: #{tpu_custom_call.1} parent=1 // pred_check_branch
      %1860 = sbr.rel (0) target = $region105
    $region104: #{tpu_custom_call.1} parent=1 // pred_region
      %1862 = vsyncadd [#allocation4], 0
      %s1864 = sshll.u32 [#allocation16], 4
      %s1865 = int_to_ptr.vmem [resolvable:$true] %s1864
      %s1866 = sshll.u32 %s17, 4
      %s1867 = int_to_ptr.hbm [resolvable:$true] %s1866
      %1869 = dma.vmem_to_hbm [thread:$0]  %s1865, 32, %s1867, [#allocation4]
    $region105: #{tpu_custom_call.1} parent=1 // pred_fallthru
      _
    // Predicated region
    $region106: #{tpu_custom_call.1} parent=1 // pred_check
      _
    $region107: #{tpu_custom_call.1} parent=1 // pred_check_branch
      %1871 = sbr.rel (0) target = $region109
    $region108: #{tpu_custom_call.1} parent=1 // pred_region
      %1873 = dma.done [#allocation4], 32
    $region109: #{tpu_custom_call.1} parent=1 // pred_fallthru
      _
    %1874 = vsyncpa [#allocation3], 1
    %1875 = vsyncpa [#allocation6], 1
    %1876 = vsyncpa [#allocation9], 1
    %1877 = vsyncpa [#allocation12], 1
    %1878 = vsyncpa [#allocation15], 1
    %1879 = vsyncpa [#allocation4], 1

</llo_original>
